<compile_context>
chip_gen: v7x
topology: tpu7x:2x2x1
jax: 0.10.0
libtpu: 0.0.40
codegen_flags: <defaults>
</compile_context>

<pallas_src>
import jax
import jax.numpy as jnp
from jax.experimental import pallas as pl
from jax.experimental.pallas import tpu as pltpu

BN_EPS = 1e-5


def _round_up(x, m):
    return ((x + m - 1) // m) * m


# ---------------------------------------------------------------------------
# Kernel factory: all sizes / slab offsets are static Python ints.
# ---------------------------------------------------------------------------
def _make_kernel(dims):
    K1 = dims["K1"]          # width of the flattened, concatenated input
    Wlane = dims["Wlane"]    # padded hidden/post width (multiple of 8)
    Fpad = dims["Fpad"]      # fusion width padded to a multiple of 128
    OUT = dims["OUT"]        # output_size

    rK = _round_up(K1, 8)
    r_w2 = rK                 # stacked block-diagonal layer-2 weight
    r_w3 = rK + Wlane         # stacked layer-3 weight (+ ones column via bias)
    r_pw2 = rK + 2 * Wlane    # post-fusion layer-2 weight
    r_bias = rK + 3 * Wlane   # 8-row bias block
    r_pw3 = r_bias + 8        # post-fusion layer-3 weight (transposed rows)

    def kernel(x_ref, w_ref, e_ref, pw1_ref, out_ref):
        bias = w_ref[r_bias:r_bias + 8, :]            # (8, Wlane), one vreg-ish
        x = x_ref[...]                                 # (B, K1) lane-dense

        # mean + BN + Linear1 of all three modalities: ONE matmul
        h1 = jnp.maximum(
            jnp.dot(x, w_ref[0:K1, :], preferred_element_type=jnp.float32)
            + bias[0:1, :], 0.0)
        # layer 2 / layer 3 (block-diagonal stacked), layer 3 emits the "ones"
        # column used by tensor fusion (zero weights + bias 1)
        h2 = jnp.maximum(
            jnp.dot(h1, w_ref[r_w2:r_w2 + Wlane, :],
                    preferred_element_type=jnp.float32) + bias[1:2, :], 0.0)
        h3 = jnp.maximum(
            jnp.dot(h2, w_ref[r_w3:r_w3 + Wlane, :],
                    preferred_element_type=jnp.float32) + bias[2:3, :], 0.0)

        # tensor fusion: one matmul with the 0/1 expansion matrix (bf16, exact)
        # then an elementwise triple product on 128-aligned slices.
        exp = jnp.dot(h3, e_ref[...].astype(jnp.float32),
                      preferred_element_type=jnp.float32)      # (B, 3*Fpad)
        fusion = (exp[:, 0:Fpad]
                  * exp[:, Fpad:2 * Fpad]
                  * exp[:, 2 * Fpad:3 * Fpad])                 # (B, Fpad)

        # post-fusion MLP (dropout = identity)
        y1 = jnp.maximum(
            jnp.dot(fusion, pw1_ref[...],
                    preferred_element_type=jnp.float32) + bias[3:4, :], 0.0)
        y2 = jnp.maximum(
            jnp.dot(y1, w_ref[r_pw2:r_pw2 + Wlane, :],
                    preferred_element_type=jnp.float32) + bias[4:5, :], 0.0)

        if OUT == 1:
            # (P,1) projection as VPU multiply + lane reduce (no N=1 MXU issue)
            z = jnp.sum(y2 * w_ref[r_pw3:r_pw3 + 1, :], axis=-1,
                        keepdims=True) + bias[5:6, 0:1]
        else:
            pw3t = w_ref[r_pw3:r_pw3 + OUT, :]
            z = jax.lax.dot_general(
                y2, pw3t, (((1,), (1,)), ((), ())),
                preferred_element_type=jnp.float32) + bias[5:6, 0:OUT]

        sig = pl.reciprocal(1.0 + jnp.exp(-z))        # exact sigmoid
        out_ref[...] = sig * 6.0 + (-3.0)             # output_range=6, shift=-3

    return kernel


def fusion_forward(audio_x, video_x, text_x, lengths_x, fused):
    dims = fused["dims"]
    B = lengths_x.shape[0]

    # Layout plumbing in the wrapper (not compute): (L, B, D) -> (B, L*D) and
    # concatenate the modalities along lanes -> lane-dense (B, K1) input.
    def flat(x):
        return jnp.transpose(x, (1, 0, 2)).reshape(B, -1)

    x = jnp.concatenate([flat(audio_x), flat(video_x), flat(text_x)], axis=1)

    kernel = _make_kernel(dims)
    return pl.pallas_call(
        kernel,
        out_shape=jax.ShapeDtypeStruct((B, dims["OUT"]), jnp.float32),
        in_specs=[pl.BlockSpec(memory_space=pltpu.MemorySpace.VMEM)] * 4,
        out_specs=pl.BlockSpec(memory_space=pltpu.MemorySpace.VMEM),
    )(x, fused["w_slab"], fused["e"], fused["pw1"])


# ---------------------------------------------------------------------------
# Parameter initialization (mimics nn.Linear default init; BatchNorm1d uses its
# fresh-__init__ buffers: mean=0, var=1, gamma=1, beta=0)
# ---------------------------------------------------------------------------
def _linear_init(key, fan_in, fan_out):
    kw, kb = jax.random.split(key)
    bound = 1.0 / (fan_in ** 0.5)
    w = jax.random.uniform(kw, (fan_in, fan_out), jnp.float32, -bound, bound)
    b = jax.random.uniform(kb, (1, fan_out), jnp.float32, -bound, bound)
    return w, b


def _dnn_params(key, in_size, hidden):
    k1, k2, k3 = jax.random.split(key, 3)
    w1, b1 = _linear_init(k1, in_size, hidden)
    w2, b2 = _linear_init(k2, hidden, hidden)
    w3, b3 = _linear_init(k3, hidden, hidden)
    return dict(
        bn_mean=jnp.zeros((1, in_size), jnp.float32),
        bn_var=jnp.ones((1, in_size), jnp.float32),
        bn_gamma=jnp.ones((1, in_size), jnp.float32),
        bn_beta=jnp.zeros((1, in_size), jnp.float32),
        w1=w1, b1=b1, w2=w2, b2=b2, w3=w3, b3=b3)


def init_fusion_params(key, input_sizes, hidden_sizes, post_fusion_dim, output_size):
    text_in, video_in, audio_in = input_sizes
    text_h, video_h, audio_h = hidden_sizes
    kt, kv, ka, k1, k2, k3 = jax.random.split(key, 6)
    F = (text_h + 1) * (video_h + 1) * (audio_h + 1)
    pw1, pb1 = _linear_init(k1, F, post_fusion_dim)
    pw2, pb2 = _linear_init(k2, post_fusion_dim, post_fusion_dim)
    pw3, pb3 = _linear_init(k3, post_fusion_dim, output_size)
    return dict(
        text=_dnn_params(kt, text_in, text_h),
        video=_dnn_params(kv, video_in, video_h),
        audio=_dnn_params(ka, audio_in, audio_h),
        post=dict(w1=pw1, b1=pb1, w2=pw2, b2=pb2, w3=pw3, b3=pb3))


# ---------------------------------------------------------------------------
# One-time parameter preparation (plain JAX, outside the kernel):
#   BN fold, sequence-mean fold, block-diagonal stacking, "ones"-column fold,
#   one packed weight/bias slab, bf16 0/1 expansion matrix, lane-padded pw1.
# ---------------------------------------------------------------------------
def prepare_fused_params(params, max_len):
    pa, pv, pt = params["audio"], params["video"], params["text"]
    pp = params["post"]
    Da, Dv, Dt = pa["w1"].shape[0], pv["w1"].shape[0], pt["w1"].shape[0]
    Ha, Hv, Ht = pa["w1"].shape[1], pv["w1"].shape[1], pt["w1"].shape[1]
    sumH = Ha + Hv + Ht
    P = pp["w1"].shape[1]
    OUT = pp["w3"].shape[1]
    V1, T1 = Hv + 1, Ht + 1
    F = (Ha + 1) * V1 * T1
    Fpad = _round_up(F, 128)
    Wlane = _round_up(max(sumH + 1, P), 8)
    L = max_len
    K1 = L * (Da + Dv + Dt)

    rK = _round_up(K1, 8)
    r_w2, r_w3, r_pw2 = rK, rK + Wlane, rK + 2 * Wlane
    r_bias = rK + 3 * Wlane
    r_pw3 = r_bias + 8
    n_rows = r_pw3 + _round_up(OUT, 8)

    def fold_bn(p):
        scale = p["bn_gamma"] * jax.lax.rsqrt(p["bn_var"] + BN_EPS)   # (1, D)
        shift = p["bn_beta"] - p["bn_mean"] * scale                   # (1, D)
        w1f = scale.reshape(-1, 1) * p["w1"]                          # (D, H)
        b1f = p["b1"] + shift @ p["w1"]                               # (1, H)
        return w1f, b1f

    w1af, b1af = fold_bn(pa)
    w1vf, b1vf = fold_bn(pv)
    w1tf, b1tf = fold_bn(pt)

    def mean_fold(w1f):                      # fold mean over L into the weight
        return jnp.tile(w1f, (L, 1)) / float(L)   # (L*D, H)

    # Layer 1: one stacked, column-extended weight (K1, Wlane)
    w1_stack = jnp.zeros((K1, Wlane), jnp.float32)
    w1_stack = w1_stack.at[0:L * Da, 0:Ha].set(mean_fold(w1af))
    w1_stack = w1_stack.at[L * Da:L * (Da + Dv), Ha:Ha + Hv].set(mean_fold(w1vf))
    w1_stack = w1_stack.at[L * (Da + Dv):K1, Ha + Hv:sumH].set(mean_fold(w1tf))

    def block_diag3(wa, wv, wt):
        out = jnp.zeros((Wlane, Wlane), jnp.float32)
        out = out.at[0:Ha, 0:Ha].set(wa)
        out = out.at[Ha:Ha + Hv, Ha:Ha + Hv].set(wv)
        out = out.at[Ha + Hv:sumH, Ha + Hv:sumH].set(wt)
        return out

    w2 = block_diag3(pa["w2"], pv["w2"], pt["w2"])
    w3 = block_diag3(pa["w3"], pv["w3"], pt["w3"])   # ones column = zero weights
    pw2 = jnp.zeros((Wlane, Wlane), jnp.float32).at[0:P, 0:P].set(pp["w2"])

    # Bias block (8, Wlane): b1, b2, b3(+ones col), pb1, pb2, pb3
    bias = jnp.zeros((8, Wlane), jnp.float32)
    bias = bias.at[0, 0:sumH].set(jnp.concatenate([b1af, b1vf, b1tf], axis=1)[0])
    bias = bias.at[1, 0:sumH].set(
        jnp.concatenate([pa["b2"], pv["b2"], pt["b2"]], axis=1)[0])
    b3row = jnp.zeros((Wlane,), jnp.float32)
    b3row = b3row.at[0:sumH].set(
        jnp.concatenate([pa["b3"], pv["b3"], pt["b3"]], axis=1)[0])
    b3row = b3row.at[sumH].set(1.0)          # relu(0 + 1) = 1 -> the "ones" lane
    bias = bias.at[2].set(b3row)
    bias = bias.at[3, 0:P].set(pp["b1"][0])
    bias = bias.at[4, 0:P].set(pp["b2"][0])
    bias = bias.at[5, 0:OUT].set(pp["b3"][0])

    pw3t = jnp.zeros((_round_up(OUT, 8), Wlane), jnp.float32)
    pw3t = pw3t.at[0:OUT, 0:P].set(pp["w3"].T)

    # One packed slab -> one DMA for all small weights/biases
    w_slab = jnp.zeros((n_rows, Wlane), jnp.float32)
    w_slab = w_slab.at[0:K1, :].set(w1_stack)
    w_slab = w_slab.at[r_w2:r_w2 + Wlane, :].set(w2)
    w_slab = w_slab.at[r_w3:r_w3 + Wlane, :].set(w3)
    w_slab = w_slab.at[r_pw2:r_pw2 + Wlane, :].set(pw2)
    w_slab = w_slab.at[r_bias:r_bias + 8, :].set(bias)
    w_slab = w_slab.at[r_pw3:r_pw3 + pw3t.shape[0], :].set(pw3t)

    # Expansion matrix E (Wlane, 3*Fpad), 0/1 entries -> bf16 is exact.
    # fusion index m = (i*V1 + j)*T1 + k (audio, video, text) = torch flatten order.
    m = jnp.arange(F)
    i_idx = m // (V1 * T1)
    j_idx = (m // T1) % V1
    k_idx = m % T1
    rows = jnp.arange(Wlane)[:, None]

    def exp_block(idx, base):
        hit_ones = (rows == sumH) & (idx[None, :] == 0)
        hit_hid = (idx[None, :] > 0) & (rows == base + idx[None, :] - 1)
        blk = (hit_ones | hit_hid).astype(jnp.float32)       # (Wlane, F)
        return jnp.pad(blk, ((0, 0), (0, Fpad - F)))         # 128-aligned block

    e = jnp.concatenate(
        [exp_block(i_idx, 0), exp_block(j_idx, Ha), exp_block(k_idx, Ha + Hv)],
        axis=1).astype(jnp.bfloat16)                         # (Wlane, 3*Fpad)

    # Post-fusion layer-1 weight padded to (Fpad, Wlane); kept f32 for exactness.
    pw1 = jnp.zeros((Fpad, Wlane), jnp.float32).at[0:F, 0:P].set(pp["w1"])

    dims = dict(K1=K1, sumH=sumH, Wlane=Wlane, P=P, Fpad=Fpad, OUT=OUT, L=L)
    return dict(w_slab=w_slab, e=e, pw1=pw1, dims=dims)


# ---------------------------------------------------------------------------
# Pure-JAX reference mirroring the torch forward exactly (for validation)
# ---------------------------------------------------------------------------
def fusion_reference(audio_x, video_x, text_x, lengths_x, params):
    def dnn(x, p):
        xm = jnp.mean(x, axis=0)
        inv = jax.lax.rsqrt(p["bn_var"] + BN_EPS)
        normed = (xm - p["bn_mean"]) * inv * p["bn_gamma"] + p["bn_beta"]
        y1 = jnp.maximum(normed @ p["w1"] + p["b1"], 0.0)
        y2 = jnp.maximum(y1 @ p["w2"] + p["b2"], 0.0)
        return jnp.maximum(y2 @ p["w3"] + p["b3"], 0.0)

    ah = dnn(audio_x, params["audio"])
    vh = dnn(video_x, params["video"])
    th = dnn(text_x, params["text"])
    B = lengths_x.shape[0]
    ones = jnp.ones((B, 1), jnp.float32)
    _a = jnp.concatenate([ones, ah], axis=1)
    _v = jnp.concatenate([ones, vh], axis=1)
    _t = jnp.concatenate([ones, th], axis=1)
    fusion = (_a[:, :, None, None] * _v[:, None, :, None]
              * _t[:, None, None, :]).reshape(B, -1)
    pp = params["post"]
    y1 = jnp.maximum(fusion @ pp["w1"] + pp["b1"], 0.0)
    y2 = jnp.maximum(y1 @ pp["w2"] + pp["b2"], 0.0)
    return jax.nn.sigmoid(y2 @ pp["w3"] + pp["b3"]) * 6.0 - 3.0


if __name__ == "__main__":
    key = jax.random.PRNGKey(0)
    max_len, batch = 8, 8
    input_sizes = [16, 16, 16]      # [text_dim, visual_dim, audio_dim]
    hidden_sizes = [8, 8, 8]        # [text_h, video_h, audio_h]
    post_fusion_dim = 32
    output_size = 1

    kp, ka, kv, kt = jax.random.split(key, 4)
    params = init_fusion_params(kp, input_sizes, hidden_sizes,
                                post_fusion_dim, output_size)
    fused = prepare_fused_params(params, max_len)

    audio_x = jax.random.normal(ka, (max_len, batch, input_sizes[2]), jnp.float32)
    video_x = jax.random.normal(kv, (max_len, batch, input_sizes[1]), jnp.float32)
    text_x = jax.random.normal(kt, (max_len, batch, input_sizes[0]), jnp.float32)
    lengths_x = jnp.full((batch,), max_len, jnp.int32)

    out = fusion_forward(audio_x, video_x, text_x, lengths_x, fused)
    out = jax.block_until_ready(out)

    assert out.shape == (batch, output_size), out.shape
    assert bool(jnp.all(jnp.isfinite(out)))
    ref = fusion_reference(audio_x, video_x, text_x, lengths_x, params)
    assert bool(jnp.allclose(out, ref, atol=1e-3, rtol=1e-3)), (out, ref)
    print("KERNEL_OK")
</pallas_src>

<mosaic_0001>
module attributes {stable_mosaic.version = 11 : i64} {
  func.func @kernel(%arg0: memref<8x384xf32, #tpu.memory_space<vmem>>, %arg1: memref<496x32xf32, #tpu.memory_space<vmem>>, %arg2: memref<32x2304xbf16, #tpu.memory_space<vmem>>, %arg3: memref<768x32xf32, #tpu.memory_space<vmem>>, %arg4: memref<8x1xf32, #tpu.memory_space<vmem>>) attributes {dimension_semantics = [], scalar_prefetch = 0 : i64, scratch_operands = 0 : i64, tpu.core_type = #tpu.core_type<tc>} {
    %c480 = arith.constant 480 : index
    %c0 = arith.constant 0 : index
    %0 = vector.load %arg1[%c480, %c0] : memref<496x32xf32, #tpu.memory_space<vmem>>, vector<8x32xf32>
    %c0_0 = arith.constant 0 : index
    %c0_1 = arith.constant 0 : index
    %1 = vector.load %arg0[%c0_0, %c0_1] : memref<8x384xf32, #tpu.memory_space<vmem>>, vector<8x384xf32>
    %c0_2 = arith.constant 0 : index
    %c0_3 = arith.constant 0 : index
    %2 = vector.load %arg1[%c0_2, %c0_3] : memref<496x32xf32, #tpu.memory_space<vmem>>, vector<384x32xf32>
    %cst = arith.constant dense<0.000000e+00> : vector<8x32xf32>
    %3 = tpu.matmul %1, %2, %cst {dimension_numbers = #tpu.dot_dimension_numbers<[1], [0], [0], [1], [0, 0, 1, 1], [], []>} : vector<8x384xf32>, vector<384x32xf32>, vector<8x32xf32> -> vector<8x32xf32>
    %4 = vector.extract_strided_slice %0 {offsets = [0, 0], sizes = [1, 32], strides = [1, 1]} : vector<8x32xf32> to vector<1x32xf32>
    %5 = vector.broadcast %4 : vector<1x32xf32> to vector<8x32xf32>
    %6 = arith.addf %3, %5 : vector<8x32xf32>
    %cst_4 = arith.constant 0.000000e+00 : f32
    %7 = vector.broadcast %cst_4 : f32 to vector<8x32xf32>
    %8 = arith.maximumf %6, %7 : vector<8x32xf32>
    %c384 = arith.constant 384 : index
    %c0_5 = arith.constant 0 : index
    %9 = vector.load %arg1[%c384, %c0_5] : memref<496x32xf32, #tpu.memory_space<vmem>>, vector<32x32xf32>
    %cst_6 = arith.constant dense<0.000000e+00> : vector<8x32xf32>
    %10 = tpu.matmul %8, %9, %cst_6 {dimension_numbers = #tpu.dot_dimension_numbers<[1], [0], [0], [1], [0, 0, 1, 1], [], []>} : vector<8x32xf32>, vector<32x32xf32>, vector<8x32xf32> -> vector<8x32xf32>
    %11 = vector.extract_strided_slice %0 {offsets = [1, 0], sizes = [1, 32], strides = [1, 1]} : vector<8x32xf32> to vector<1x32xf32>
    %12 = vector.broadcast %11 : vector<1x32xf32> to vector<8x32xf32>
    %13 = arith.addf %10, %12 : vector<8x32xf32>
    %cst_7 = arith.constant 0.000000e+00 : f32
    %14 = vector.broadcast %cst_7 : f32 to vector<8x32xf32>
    %15 = arith.maximumf %13, %14 : vector<8x32xf32>
    %c416 = arith.constant 416 : index
    %c0_8 = arith.constant 0 : index
    %16 = vector.load %arg1[%c416, %c0_8] : memref<496x32xf32, #tpu.memory_space<vmem>>, vector<32x32xf32>
    %cst_9 = arith.constant dense<0.000000e+00> : vector<8x32xf32>
    %17 = tpu.matmul %15, %16, %cst_9 {dimension_numbers = #tpu.dot_dimension_numbers<[1], [0], [0], [1], [0, 0, 1, 1], [], []>} : vector<8x32xf32>, vector<32x32xf32>, vector<8x32xf32> -> vector<8x32xf32>
    %18 = vector.extract_strided_slice %0 {offsets = [2, 0], sizes = [1, 32], strides = [1, 1]} : vector<8x32xf32> to vector<1x32xf32>
    %19 = vector.broadcast %18 : vector<1x32xf32> to vector<8x32xf32>
    %20 = arith.addf %17, %19 : vector<8x32xf32>
    %cst_10 = arith.constant 0.000000e+00 : f32
    %21 = vector.broadcast %cst_10 : f32 to vector<8x32xf32>
    %22 = arith.maximumf %20, %21 : vector<8x32xf32>
    %c0_11 = arith.constant 0 : index
    %c0_12 = arith.constant 0 : index
    %23 = vector.load %arg2[%c0_11, %c0_12] : memref<32x2304xbf16, #tpu.memory_space<vmem>>, vector<32x2304xbf16>
    %24 = arith.extf %23 : vector<32x2304xbf16> to vector<32x2304xf32>
    %cst_13 = arith.constant dense<0.000000e+00> : vector<8x2304xf32>
    %25 = tpu.matmul %22, %24, %cst_13 {dimension_numbers = #tpu.dot_dimension_numbers<[1], [0], [0], [1], [0, 0, 1, 1], [], []>} : vector<8x32xf32>, vector<32x2304xf32>, vector<8x2304xf32> -> vector<8x2304xf32>
    %26 = vector.extract_strided_slice %25 {offsets = [0, 0], sizes = [8, 768], strides = [1, 1]} : vector<8x2304xf32> to vector<8x768xf32>
    %27 = vector.extract_strided_slice %25 {offsets = [0, 768], sizes = [8, 768], strides = [1, 1]} : vector<8x2304xf32> to vector<8x768xf32>
    %28 = arith.mulf %26, %27 : vector<8x768xf32>
    %29 = vector.extract_strided_slice %25 {offsets = [0, 1536], sizes = [8, 768], strides = [1, 1]} : vector<8x2304xf32> to vector<8x768xf32>
    %30 = arith.mulf %28, %29 : vector<8x768xf32>
    %c0_14 = arith.constant 0 : index
    %c0_15 = arith.constant 0 : index
    %31 = vector.load %arg3[%c0_14, %c0_15] : memref<768x32xf32, #tpu.memory_space<vmem>>, vector<768x32xf32>
    %cst_16 = arith.constant dense<0.000000e+00> : vector<8x32xf32>
    %32 = tpu.matmul %30, %31, %cst_16 {dimension_numbers = #tpu.dot_dimension_numbers<[1], [0], [0], [1], [0, 0, 1, 1], [], []>} : vector<8x768xf32>, vector<768x32xf32>, vector<8x32xf32> -> vector<8x32xf32>
    %33 = vector.extract_strided_slice %0 {offsets = [3, 0], sizes = [1, 32], strides = [1, 1]} : vector<8x32xf32> to vector<1x32xf32>
    %34 = vector.broadcast %33 : vector<1x32xf32> to vector<8x32xf32>
    %35 = arith.addf %32, %34 : vector<8x32xf32>
    %cst_17 = arith.constant 0.000000e+00 : f32
    %36 = vector.broadcast %cst_17 : f32 to vector<8x32xf32>
    %37 = arith.maximumf %35, %36 : vector<8x32xf32>
    %c448 = arith.constant 448 : index
    %c0_18 = arith.constant 0 : index
    %38 = vector.load %arg1[%c448, %c0_18] : memref<496x32xf32, #tpu.memory_space<vmem>>, vector<32x32xf32>
    %cst_19 = arith.constant dense<0.000000e+00> : vector<8x32xf32>
    %39 = tpu.matmul %37, %38, %cst_19 {dimension_numbers = #tpu.dot_dimension_numbers<[1], [0], [0], [1], [0, 0, 1, 1], [], []>} : vector<8x32xf32>, vector<32x32xf32>, vector<8x32xf32> -> vector<8x32xf32>
    %40 = vector.extract_strided_slice %0 {offsets = [4, 0], sizes = [1, 32], strides = [1, 1]} : vector<8x32xf32> to vector<1x32xf32>
    %41 = vector.broadcast %40 : vector<1x32xf32> to vector<8x32xf32>
    %42 = arith.addf %39, %41 : vector<8x32xf32>
    %cst_20 = arith.constant 0.000000e+00 : f32
    %43 = vector.broadcast %cst_20 : f32 to vector<8x32xf32>
    %44 = arith.maximumf %42, %43 : vector<8x32xf32>
    %c488 = arith.constant 488 : index
    %c0_21 = arith.constant 0 : index
    %45 = vector.load %arg1[%c488, %c0_21] : memref<496x32xf32, #tpu.memory_space<vmem>>, vector<1x32xf32>
    %46 = vector.broadcast %45 : vector<1x32xf32> to vector<8x32xf32>
    %47 = arith.mulf %44, %46 : vector<8x32xf32>
    %cst_22 = arith.constant dense<0.000000e+00> : vector<8xf32>
    %48 = vector.multi_reduction <add>, %47, %cst_22 [1] : vector<8x32xf32> to vector<8xf32>
    %49 = vector.shape_cast %48 : vector<8xf32> to vector<8x1xf32>
    %50 = vector.extract_strided_slice %0 {offsets = [5, 0], sizes = [1, 1], strides = [1, 1]} : vector<8x32xf32> to vector<1x1xf32>
    %51 = vector.broadcast %50 : vector<1x1xf32> to vector<8x1xf32>
    %52 = arith.addf %49, %51 : vector<8x1xf32>
    %cst_23 = arith.constant 0.000000e+00 : f32
    %53 = vector.broadcast %cst_23 : f32 to vector<8x1xf32>
    %54 = arith.subf %53, %52 : vector<8x1xf32>
    %55 = math.exp %54 : vector<8x1xf32>
    %cst_24 = arith.constant 1.000000e+00 : f32
    %56 = vector.broadcast %cst_24 : f32 to vector<8x1xf32>
    %57 = arith.addf %56, %55 : vector<8x1xf32>
    %58 = tpu.reciprocal %57 : vector<8x1xf32> -> vector<8x1xf32>
    %cst_25 = arith.constant 6.000000e+00 : f32
    %59 = vector.broadcast %cst_25 : f32 to vector<8x1xf32>
    %60 = arith.mulf %58, %59 : vector<8x1xf32>
    %cst_26 = arith.constant -3.000000e+00 : f32
    %61 = vector.broadcast %cst_26 : f32 to vector<8x1xf32>
    %62 = arith.addf %60, %61 : vector<8x1xf32>
    %c0_27 = arith.constant 0 : index
    %c0_28 = arith.constant 0 : index
    %63 = vector.load %arg4[%c0_27, %c0_28] : memref<8x1xf32, #tpu.memory_space<vmem>>, vector<8x1xf32>
    tpu.vector_store %arg4[%c0_27, %c0_28], %62 {strides = array<i32>} : memref<8x1xf32, #tpu.memory_space<vmem>>, vector<8x1xf32>,
    return
  }
}

</mosaic_0001>

<llo_original>
// kernel: tpu_custom_call.1
$region0: #{tpu_custom_call.1}
  #allocation0 [shape = 'u32[]', space=smem, size = 0x4, offset = 0x4, fixed_abs, tag = 'smem constant byte address 0x4 - core index']
  #allocation1 [shape = 'u32[144,128]{1,0:T(1,128)}', space=vmem, size = 0x12000, scoped, tag = 'internal scratch']
  %s0 = inlined_call_operand.vmem [shape: f32[8,384], index: 0, kind: input, shape index: {}]
  %s1 = inlined_call_operand.vmem [shape: f32[496,32], index: 1, kind: input, shape index: {}]
  %s2 = inlined_call_operand.vmem [shape: bf16[32,2304], index: 2, kind: input, shape index: {}]
  %s3 = inlined_call_operand.vmem [shape: f32[768,32], index: 3, kind: input, shape index: {}]
  %s4 = inlined_call_operand.vmem [shape: f32[8,1], index: 4, kind: output, shape index: {}]
  %s5 = sld [smem:[#allocation0]]
  $region26: #{tpu_custom_call.1} parent=0
    _
  %s7 = ssub.s32 1, %s5
  %s8 = scalar_select 0, %s7, %s5
  // Predicated region
  $region2: #{tpu_custom_call.1} parent=0 // pred_check
    _
  $region3: #{tpu_custom_call.1} parent=0 // pred_check_branch
    %10 = sbr.rel (0) target = $region5
  $region4: #{tpu_custom_call.1} parent=0 // pred_region
    _
  $region5: #{tpu_custom_call.1} parent=0 // pred_fallthru
    _
  // Predicated region
  $region6: #{tpu_custom_call.1} parent=0 // pred_check
    _
  $region7: #{tpu_custom_call.1} parent=0 // pred_check_branch
    %12 = sbr.rel (0) target = $region9
  $region8: #{tpu_custom_call.1} parent=0 // pred_region
    _
  $region9: #{tpu_custom_call.1} parent=0 // pred_fallthru
    _
  // Predicated region
  $region10: #{tpu_custom_call.1} parent=0 // pred_check
    _
  $region11: #{tpu_custom_call.1} parent=0 // pred_check_branch
    %14 = sbr.rel (0) target = $region13
  $region12: #{tpu_custom_call.1} parent=0 // pred_region
    _
  $region13: #{tpu_custom_call.1} parent=0 // pred_fallthru
    _
  // Predicated region
  $region14: #{tpu_custom_call.1} parent=0 // pred_check
    _
  $region15: #{tpu_custom_call.1} parent=0 // pred_check_branch
    %16 = sbr.rel (0) target = $region17
  $region16: #{tpu_custom_call.1} parent=0 // pred_region
    _
  $region17: #{tpu_custom_call.1} parent=0 // pred_fallthru
    _
  %v17 = vld [vmem:[%s1 + $0x1e0] sm:$0xff]
  %v18 = vld [vmem:[%s0] sm:$0xff]
  %v19 = vld [vmem:[%s0 + $0x8] sm:$0xff]
  %v20 = vld [vmem:[%s0 + $0x10] sm:$0xff]
  %v21 = vld [vmem:[%s1] sm:$0xff]
  %v22 = vld [vmem:[%s1 + $0x8] sm:$0xff]
  %v23 = vld [vmem:[%s1 + $0x10] sm:$0xff]
  %v24 = vld [vmem:[%s1 + $0x18] sm:$0xff]
  %v25 = vld [vmem:[%s1 + $0x20] sm:$0xff]
  %v26 = vld [vmem:[%s1 + $0x28] sm:$0xff]
  %v27 = vld [vmem:[%s1 + $0x30] sm:$0xff]
  %v28 = vld [vmem:[%s1 + $0x38] sm:$0xff]
  %v29 = vld [vmem:[%s1 + $0x40] sm:$0xff]
  %v30 = vld [vmem:[%s1 + $0x48] sm:$0xff]
  %v31 = vld [vmem:[%s1 + $0x50] sm:$0xff]
  %v32 = vld [vmem:[%s1 + $0x58] sm:$0xff]
  %v33 = vld [vmem:[%s1 + $0x60] sm:$0xff]
  %v34 = vld [vmem:[%s1 + $0x68] sm:$0xff]
  %v35 = vld [vmem:[%s1 + $0x70] sm:$0xff]
  %v36 = vld [vmem:[%s1 + $0x78] sm:$0xff]
  %v37 = vld [vmem:[%s1 + $0x80] sm:$0xff]
  %v38 = vld [vmem:[%s1 + $0x88] sm:$0xff]
  %v39 = vld [vmem:[%s1 + $0x90] sm:$0xff]
  %v40 = vld [vmem:[%s1 + $0x98] sm:$0xff]
  %v41 = vld [vmem:[%s1 + $0xa0] sm:$0xff]
  %v42 = vld [vmem:[%s1 + $0xa8] sm:$0xff]
  %v43 = vld [vmem:[%s1 + $0xb0] sm:$0xff]
  %v44 = vld [vmem:[%s1 + $0xb8] sm:$0xff]
  %v45 = vld [vmem:[%s1 + $0xc0] sm:$0xff]
  %v46 = vld [vmem:[%s1 + $0xc8] sm:$0xff]
  %v47 = vld [vmem:[%s1 + $0xd0] sm:$0xff]
  %v48 = vld [vmem:[%s1 + $0xd8] sm:$0xff]
  %v49 = vld [vmem:[%s1 + $0xe0] sm:$0xff]
  %v50 = vld [vmem:[%s1 + $0xe8] sm:$0xff]
  %v51 = vld [vmem:[%s1 + $0xf0] sm:$0xff]
  %v52 = vld [vmem:[%s1 + $0xf8] sm:$0xff]
  %v53 = vld [vmem:[%s1 + $0x100] sm:$0xff]
  %v54 = vld [vmem:[%s1 + $0x108] sm:$0xff]
  %v55 = vld [vmem:[%s1 + $0x110] sm:$0xff]
  %v56 = vld [vmem:[%s1 + $0x118] sm:$0xff]
  %v57 = vld [vmem:[%s1 + $0x120] sm:$0xff]
  %v58 = vld [vmem:[%s1 + $0x128] sm:$0xff]
  %v59 = vld [vmem:[%s1 + $0x130] sm:$0xff]
  %v60 = vld [vmem:[%s1 + $0x138] sm:$0xff]
  %v61 = vld [vmem:[%s1 + $0x140] sm:$0xff]
  %v62 = vld [vmem:[%s1 + $0x148] sm:$0xff]
  %v63 = vld [vmem:[%s1 + $0x150] sm:$0xff]
  %v64 = vld [vmem:[%s1 + $0x158] sm:$0xff]
  %v65 = vld [vmem:[%s1 + $0x160] sm:$0xff]
  %v66 = vld [vmem:[%s1 + $0x168] sm:$0xff]
  %v67 = vld [vmem:[%s1 + $0x170] sm:$0xff]
  %v68 = vld [vmem:[%s1 + $0x178] sm:$0xff]
  %v69 = vlaneseq
  %v70 = vshrl.u32 %v69, 7
  %v71 = vsub.s32 0, %v70
  %v72 = vrot.slane %v17, %v71
  %73 = vmatprep.subr.mxu0 0.0
  %74 = vmatpush1.msra.mxu0 %v21
  %75 = vmatprep.subr.mxu0 0.0
  %76 = vmatpush1.msra.mxu0 %v22
  %77 = vmatprep.subr.mxu0 0.0
  %78 = vmatpush1.msra.mxu0 %v23
  %79 = vmatprep.subr.mxu0 0.0
  %80 = vmatpush1.msra.mxu0 %v24
  %81 = vmatprep.subr.mxu0 0.0
  %82 = vmatpush1.msra.mxu0 %v25
  %83 = vmatprep.subr.mxu0 0.0
  %84 = vmatpush1.msra.mxu0 %v26
  %85 = vmatprep.subr.mxu0 0.0
  %86 = vmatpush1.msra.mxu0 %v27
  %87 = vmatprep.subr.mxu0 0.0
  %88 = vmatpush1.msra.mxu0 %v28
  %89 = vmatprep.subr.mxu0 0.0
  %90 = vmatpush1.msra.mxu0 %v29
  %91 = vmatprep.subr.mxu0 0.0
  %92 = vmatpush1.msra.mxu0 %v30
  %93 = vmatprep.subr.mxu0 0.0
  %94 = vmatpush1.msra.mxu0 %v31
  %95 = vmatprep.subr.mxu0 0.0
  %96 = vmatpush1.msra.mxu0 %v32
  %97 = vmatprep.subr.mxu0 0.0
  %98 = vmatpush1.msra.mxu0 %v33
  %99 = vmatprep.subr.mxu0 0.0
  %100 = vmatpush1.msra.mxu0 %v34
  %101 = vmatprep.subr.mxu0 0.0
  %102 = vmatpush1.msra.mxu0 %v35
  %103 = vmatprep.subr.mxu0 0.0
  %104 = vmatpush1.msra.mxu0 %v36
  %105 = vmatprep.subr.mxu0 0.0
  %106 = vmatpush1.msra.mxu0 %v37
  %107 = vmatprep.subr.mxu0 0.0
  %108 = vmatpush1.msra.mxu0 %v38
  %109 = vmatprep.subr.mxu0 0.0
  %110 = vmatpush1.msra.mxu0 %v39
  %111 = vmatprep.subr.mxu0 0.0
  %112 = vmatpush1.msra.mxu0 %v40
  %113 = vmatprep.subr.mxu0 0.0
  %114 = vmatpush1.msra.mxu0 %v41
  %115 = vmatprep.subr.mxu0 0.0
  %116 = vmatpush1.msra.mxu0 %v42
  %117 = vmatprep.subr.mxu0 0.0
  %118 = vmatpush1.msra.mxu0 %v43
  %119 = vmatprep.subr.mxu0 0.0
  %120 = vmatpush1.msra.mxu0 %v44
  %121 = vmatprep.subr.mxu0 0.0
  %122 = vmatpush1.msra.mxu0 %v45
  %123 = vmatprep.subr.mxu0 0.0
  %124 = vmatpush1.msra.mxu0 %v46
  %125 = vmatprep.subr.mxu0 0.0
  %126 = vmatpush1.msra.mxu0 %v47
  %127 = vmatprep.subr.mxu0 0.0
  %128 = vmatpush1.msra.mxu0 %v48
  %129 = vmatprep.subr.mxu0 0.0
  %130 = vmatpush1.msra.mxu0 %v49
  %131 = vmatprep.subr.mxu0 0.0
  %132 = vmatpush1.msra.mxu0 %v50
  %133 = vmatprep.subr.mxu0 0.0
  %134 = vmatpush1.msra.mxu0 %v51
  %135 = vmatprep.subr.mxu0 0.0
  %136 = vmatpush1.msra.mxu0 %v52
  %137 = vmatprep.mubr.f32.mxu0 %v19
  %138 = vmatmul.mubr.f32.gmra.mrb[0].mxu0 %v18
  %v139 = vpop.f32.mrb[0].mxu0
  %v140 = vadd.f32 %v72, %v139
  %v141 = vpop.f32.mrb[0].mxu0
  %142 = vdwg.mxu0
  %143 = vmatprep.subr.mxu0 0.0
  %144 = vmatpush1.msra.mxu0 %v53
  %145 = vmatprep.subr.mxu0 0.0
  %146 = vmatpush1.msra.mxu0 %v54
  %147 = vmatprep.subr.mxu0 0.0
  %148 = vmatpush1.msra.mxu0 %v55
  %149 = vmatprep.subr.mxu0 0.0
  %150 = vmatpush1.msra.mxu0 %v56
  %151 = vmatprep.subr.mxu0 0.0
  %152 = vmatpush1.msra.mxu0 %v57
  %153 = vmatprep.subr.mxu0 0.0
  %154 = vmatpush1.msra.mxu0 %v58
  %155 = vmatprep.subr.mxu0 0.0
  %156 = vmatpush1.msra.mxu0 %v59
  %157 = vmatprep.subr.mxu0 0.0
  %158 = vmatpush1.msra.mxu0 %v60
  %159 = vmatprep.subr.mxu0 0.0
  %160 = vmatpush1.msra.mxu0 %v61
  %161 = vmatprep.subr.mxu0 0.0
  %162 = vmatpush1.msra.mxu0 %v62
  %163 = vmatprep.subr.mxu0 0.0
  %164 = vmatpush1.msra.mxu0 %v63
  %165 = vmatprep.subr.mxu0 0.0
  %166 = vmatpush1.msra.mxu0 %v64
  %167 = vmatprep.subr.mxu0 0.0
  %168 = vmatpush1.msra.mxu0 %v65
  %169 = vmatprep.subr.mxu0 0.0
  %170 = vmatpush1.msra.mxu0 %v66
  %171 = vmatprep.subr.mxu0 0.0
  %172 = vmatpush1.msra.mxu0 %v67
  %173 = vmatprep.subr.mxu0 0.0
  %174 = vmatpush1.msra.mxu0 %v68
  %175 = vmatprep.subr.mxu0 0.0
  %176 = vmatpush1.msra.mxu0 0.0
  %177 = vmatprep.subr.mxu0 0.0
  %178 = vmatpush1.msra.mxu0 0.0
  %179 = vmatprep.subr.mxu0 0.0
  %180 = vmatpush1.msra.mxu0 0.0
  %181 = vmatprep.subr.mxu0 0.0
  %182 = vmatpush1.msra.mxu0 0.0
  %183 = vmatprep.subr.mxu0 0.0
  %184 = vmatpush1.msra.mxu0 0.0
  %185 = vmatprep.subr.mxu0 0.0
  %186 = vmatpush1.msra.mxu0 0.0
  %187 = vmatprep.subr.mxu0 0.0
  %188 = vmatpush1.msra.mxu0 0.0
  %189 = vmatprep.subr.mxu0 0.0
  %190 = vmatpush1.msra.mxu0 0.0
  %191 = vmatprep.subr.mxu0 0.0
  %192 = vmatpush1.msra.mxu0 0.0
  %193 = vmatprep.subr.mxu0 0.0
  %194 = vmatpush1.msra.mxu0 0.0
  %195 = vmatprep.subr.mxu0 0.0
  %196 = vmatpush1.msra.mxu0 0.0
  %197 = vmatprep.subr.mxu0 0.0
  %198 = vmatpush1.msra.mxu0 0.0
  %199 = vmatprep.subr.mxu0 0.0
  %200 = vmatpush1.msra.mxu0 0.0
  %201 = vmatprep.subr.mxu0 0.0
  %202 = vmatpush1.msra.mxu0 0.0
  %203 = vmatprep.subr.mxu0 0.0
  %204 = vmatpush1.msra.mxu0 0.0
  %205 = vmatprep.subr.mxu0 0.0
  %206 = vmatpush1.msra.mxu0 0.0
  %207 = vmatprep.mubr.f32.mxu0 0.0
  %208 = vmatmul.mubr.f32.gmra.mrb[0].mxu0 %v20
  %v209 = vpop.f32.mrb[0].mxu0
  %v210 = vadd.f32 %v140, %v209
  %v211 = vpop.f32.mrb[0].mxu0
  %212 = vdwg.mxu0
  %v213 = vmax.f32 %v210, 0.0
  %v214 = vld [vmem:[%s1 + $0x180] sm:$0xff]
  %v215 = vld [vmem:[%s1 + $0x188] sm:$0xff]
  %v216 = vld [vmem:[%s1 + $0x190] sm:$0xff]
  %v217 = vld [vmem:[%s1 + $0x198] sm:$0xff]
  %v218 = vlaneseq
  %v219 = vshrl.u32 %v218, 7
  %v220 = vsub.s32 1, %v219
  %v221 = vrot.slane %v17, %v220
  %vm222 = vcmask 261120
  %v224 = vsel %vm222, %v213, 0
  %226 = vmatprep.subr.mxu0 0.0
  %227 = vmatpush1.msra.mxu0 %v214
  %228 = vmatprep.subr.mxu0 0.0
  %229 = vmatpush1.msra.mxu0 %v215
  %230 = vmatprep.subr.mxu0 0.0
  %231 = vmatpush1.msra.mxu0 %v216
  %232 = vmatprep.subr.mxu0 0.0
  %233 = vmatpush1.msra.mxu0 %v217
  %234 = vmatprep.subr.mxu0 0.0
  %235 = vmatpush1.msra.mxu0 0.0
  %236 = vmatprep.subr.mxu0 0.0
  %237 = vmatpush1.msra.mxu0 0.0
  %238 = vmatprep.subr.mxu0 0.0
  %239 = vmatpush1.msra.mxu0 0.0
  %240 = vmatprep.subr.mxu0 0.0
  %241 = vmatpush1.msra.mxu0 0.0
  %242 = vmatprep.subr.mxu0 0.0
  %243 = vmatpush1.msra.mxu0 0.0
  %244 = vmatprep.subr.mxu0 0.0
  %245 = vmatpush1.msra.mxu0 0.0
  %246 = vmatprep.subr.mxu0 0.0
  %247 = vmatpush1.msra.mxu0 0.0
  %248 = vmatprep.subr.mxu0 0.0
  %249 = vmatpush1.msra.mxu0 0.0
  %250 = vmatprep.subr.mxu0 0.0
  %251 = vmatpush1.msra.mxu0 0.0
  %252 = vmatprep.subr.mxu0 0.0
  %253 = vmatpush1.msra.mxu0 0.0
  %254 = vmatprep.subr.mxu0 0.0
  %255 = vmatpush1.msra.mxu0 0.0
  %256 = vmatprep.subr.mxu0 0.0
  %257 = vmatpush1.msra.mxu0 0.0
  %258 = vmatprep.subr.mxu0 0.0
  %259 = vmatpush1.msra.mxu0 0.0
  %260 = vmatprep.subr.mxu0 0.0
  %261 = vmatpush1.msra.mxu0 0.0
  %262 = vmatprep.subr.mxu0 0.0
  %263 = vmatpush1.msra.mxu0 0.0
  %264 = vmatprep.subr.mxu0 0.0
  %265 = vmatpush1.msra.mxu0 0.0
  %266 = vmatprep.subr.mxu0 0.0
  %267 = vmatpush1.msra.mxu0 0.0
  %268 = vmatprep.subr.mxu0 0.0
  %269 = vmatpush1.msra.mxu0 0.0
  %270 = vmatprep.subr.mxu0 0.0
  %271 = vmatpush1.msra.mxu0 0.0
  %272 = vmatprep.subr.mxu0 0.0
  %273 = vmatpush1.msra.mxu0 0.0
  %274 = vmatprep.subr.mxu0 0.0
  %275 = vmatpush1.msra.mxu0 0.0
  %276 = vmatprep.subr.mxu0 0.0
  %277 = vmatpush1.msra.mxu0 0.0
  %278 = vmatprep.subr.mxu0 0.0
  %279 = vmatpush1.msra.mxu0 0.0
  %280 = vmatprep.subr.mxu0 0.0
  %281 = vmatpush1.msra.mxu0 0.0
  %282 = vmatprep.subr.mxu0 0.0
  %283 = vmatpush1.msra.mxu0 0.0
  %284 = vmatprep.subr.mxu0 0.0
  %285 = vmatpush1.msra.mxu0 0.0
  %286 = vmatprep.subr.mxu0 0.0
  %287 = vmatpush1.msra.mxu0 0.0
  %288 = vmatprep.subr.mxu0 0.0
  %289 = vmatpush1.msra.mxu0 0.0
  %290 = vmatprep.mubr.f32.mxu0 0.0
  %291 = vmatmul.mubr.f32.gmra.mrb[0].mxu0 %v224
  %v292 = vpop.f32.mrb[0].mxu0
  %v293 = vadd.f32 %v221, %v292
  %v294 = vpop.f32.mrb[0].mxu0
  %295 = vdwg.mxu0
  %v296 = vmax.f32 %v293, 0.0
  %v297 = vld [vmem:[%s1 + $0x1a0] sm:$0xff]
  %v298 = vld [vmem:[%s1 + $0x1a8] sm:$0xff]
  %v299 = vld [vmem:[%s1 + $0x1b0] sm:$0xff]
  %v300 = vld [vmem:[%s1 + $0x1b8] sm:$0xff]
  %v301 = vlaneseq
  %v302 = vshrl.u32 %v301, 7
  %v303 = vsub.s32 2, %v302
  %v304 = vrot.slane %v17, %v303
  %v306 = vsel %vm222, %v296, 0
  %308 = vmatprep.subr.mxu0 0.0
  %309 = vmatpush1.msra.mxu0 %v297
  %310 = vmatprep.subr.mxu0 0.0
  %311 = vmatpush1.msra.mxu0 %v298
  %312 = vmatprep.subr.mxu0 0.0
  %313 = vmatpush1.msra.mxu0 %v299
  %314 = vmatprep.subr.mxu0 0.0
  %315 = vmatpush1.msra.mxu0 %v300
  %316 = vmatprep.subr.mxu0 0.0
  %317 = vmatpush1.msra.mxu0 0.0
  %318 = vmatprep.subr.mxu0 0.0
  %319 = vmatpush1.msra.mxu0 0.0
  %320 = vmatprep.subr.mxu0 0.0
  %321 = vmatpush1.msra.mxu0 0.0
  %322 = vmatprep.subr.mxu0 0.0
  %323 = vmatpush1.msra.mxu0 0.0
  %324 = vmatprep.subr.mxu0 0.0
  %325 = vmatpush1.msra.mxu0 0.0
  %326 = vmatprep.subr.mxu0 0.0
  %327 = vmatpush1.msra.mxu0 0.0
  %328 = vmatprep.subr.mxu0 0.0
  %329 = vmatpush1.msra.mxu0 0.0
  %330 = vmatprep.subr.mxu0 0.0
  %331 = vmatpush1.msra.mxu0 0.0
  %332 = vmatprep.subr.mxu0 0.0
  %333 = vmatpush1.msra.mxu0 0.0
  %334 = vmatprep.subr.mxu0 0.0
  %335 = vmatpush1.msra.mxu0 0.0
  %336 = vmatprep.subr.mxu0 0.0
  %337 = vmatpush1.msra.mxu0 0.0
  %338 = vmatprep.subr.mxu0 0.0
  %339 = vmatpush1.msra.mxu0 0.0
  %340 = vmatprep.subr.mxu0 0.0
  %341 = vmatpush1.msra.mxu0 0.0
  %342 = vmatprep.subr.mxu0 0.0
  %343 = vmatpush1.msra.mxu0 0.0
  %344 = vmatprep.subr.mxu0 0.0
  %345 = vmatpush1.msra.mxu0 0.0
  %346 = vmatprep.subr.mxu0 0.0
  %347 = vmatpush1.msra.mxu0 0.0
  %348 = vmatprep.subr.mxu0 0.0
  %349 = vmatpush1.msra.mxu0 0.0
  %350 = vmatprep.subr.mxu0 0.0
  %351 = vmatpush1.msra.mxu0 0.0
  %352 = vmatprep.subr.mxu0 0.0
  %353 = vmatpush1.msra.mxu0 0.0
  %354 = vmatprep.subr.mxu0 0.0
  %355 = vmatpush1.msra.mxu0 0.0
  %356 = vmatprep.subr.mxu0 0.0
  %357 = vmatpush1.msra.mxu0 0.0
  %358 = vmatprep.subr.mxu0 0.0
  %359 = vmatpush1.msra.mxu0 0.0
  %360 = vmatprep.subr.mxu0 0.0
  %361 = vmatpush1.msra.mxu0 0.0
  %362 = vmatprep.subr.mxu0 0.0
  %363 = vmatpush1.msra.mxu0 0.0
  %364 = vmatprep.subr.mxu0 0.0
  %365 = vmatpush1.msra.mxu0 0.0
  %366 = vmatprep.subr.mxu0 0.0
  %367 = vmatpush1.msra.mxu0 0.0
  %368 = vmatprep.subr.mxu0 0.0
  %369 = vmatpush1.msra.mxu0 0.0
  %370 = vmatprep.subr.mxu0 0.0
  %371 = vmatpush1.msra.mxu0 0.0
  %372 = vmatprep.mubr.f32.mxu0 0.0
  %373 = vmatmul.mubr.f32.gmra.mrb[0].mxu0 %v306
  %v374 = vpop.f32.mrb[0].mxu0
  %v375 = vadd.f32 %v304, %v374
  %v376 = vpop.f32.mrb[0].mxu0
  %377 = vdwg.mxu0
  %v378 = vmax.f32 %v375, 0.0
  %v379 = vld [vmem:[%s2] sm:$0xff]
  %v380 = vld [vmem:[%s2 + $0x8] sm:$0xff]
  %v381 = vld [vmem:[%s2 + $0x10] sm:$0xff]
  %v382 = vld [vmem:[%s2 + $0x18] sm:$0xff]
  %v383 = vld [vmem:[%s2 + $0x20] sm:$0xff]
  %v384 = vld [vmem:[%s2 + $0x28] sm:$0xff]
  %v385 = vld [vmem:[%s2 + $0x30] sm:$0xff]
  %v386 = vld [vmem:[%s2 + $0x38] sm:$0xff]
  %v387 = vld [vmem:[%s2 + $0x40] sm:$0xff]
  %v388 = vld [vmem:[%s2 + $0x48] sm:$0xff]
  %v389 = vld [vmem:[%s2 + $0x50] sm:$0xff]
  %v390 = vld [vmem:[%s2 + $0x58] sm:$0xff]
  %v391 = vld [vmem:[%s2 + $0x60] sm:$0xff]
  %v392 = vld [vmem:[%s2 + $0x68] sm:$0xff]
  %v393 = vld [vmem:[%s2 + $0x70] sm:$0xff]
  %v394 = vld [vmem:[%s2 + $0x78] sm:$0xff]
  %v395 = vld [vmem:[%s2 + $0x80] sm:$0xff]
  %v396 = vld [vmem:[%s2 + $0x88] sm:$0xff]
  %v397 = vld [vmem:[%s2 + $0x90] sm:$0xff]
  %v398 = vld [vmem:[%s2 + $0x98] sm:$0xff]
  %v399 = vld [vmem:[%s2 + $0xa0] sm:$0xff]
  %v400 = vld [vmem:[%s2 + $0xa8] sm:$0xff]
  %v401 = vld [vmem:[%s2 + $0xb0] sm:$0xff]
  %v402 = vld [vmem:[%s2 + $0xb8] sm:$0xff]
  %v403 = vld [vmem:[%s2 + $0xc0] sm:$0xff]
  %v404 = vld [vmem:[%s2 + $0xc8] sm:$0xff]
  %v405 = vld [vmem:[%s2 + $0xd0] sm:$0xff]
  %v406 = vld [vmem:[%s2 + $0xd8] sm:$0xff]
  %v407 = vld [vmem:[%s2 + $0xe0] sm:$0xff]
  %v408 = vld [vmem:[%s2 + $0xe8] sm:$0xff]
  %v409 = vld [vmem:[%s2 + $0xf0] sm:$0xff]
  %v410 = vld [vmem:[%s2 + $0xf8] sm:$0xff]
  %v411 = vld [vmem:[%s2 + $0x100] sm:$0xff]
  %v412 = vld [vmem:[%s2 + $0x108] sm:$0xff]
  %v413 = vld [vmem:[%s2 + $0x110] sm:$0xff]
  %v414 = vld [vmem:[%s2 + $0x118] sm:$0xff]
  %v415 = vunpack.c.l.bf16 %v379
  %v416 = vunpack.c.h.bf16 %v379
  %v417 = vunpack.c.l.bf16 %v380
  %v418 = vunpack.c.h.bf16 %v380
  %v419 = vunpack.c.l.bf16 %v381
  %v420 = vunpack.c.h.bf16 %v381
  %v421 = vunpack.c.l.bf16 %v382
  %v422 = vunpack.c.h.bf16 %v382
  %v423 = vunpack.c.l.bf16 %v383
  %v424 = vunpack.c.h.bf16 %v383
  %v425 = vunpack.c.l.bf16 %v384
  %v426 = vunpack.c.h.bf16 %v384
  %v427 = vunpack.c.l.bf16 %v385
  %v428 = vunpack.c.h.bf16 %v385
  %v429 = vunpack.c.l.bf16 %v386
  %v430 = vunpack.c.h.bf16 %v386
  %v431 = vunpack.c.l.bf16 %v387
  %v432 = vunpack.c.h.bf16 %v387
  %v433 = vunpack.c.l.bf16 %v388
  %v434 = vunpack.c.h.bf16 %v388
  %v435 = vunpack.c.l.bf16 %v389
  %v436 = vunpack.c.h.bf16 %v389
  %v437 = vunpack.c.l.bf16 %v390
  %v438 = vunpack.c.h.bf16 %v390
  %v439 = vunpack.c.l.bf16 %v391
  %v440 = vunpack.c.h.bf16 %v391
  %v441 = vunpack.c.l.bf16 %v392
  %v442 = vunpack.c.h.bf16 %v392
  %v443 = vunpack.c.l.bf16 %v393
  %v444 = vunpack.c.h.bf16 %v393
  %v445 = vunpack.c.l.bf16 %v394
  %v446 = vunpack.c.h.bf16 %v394
  %v447 = vunpack.c.l.bf16 %v395
  %v448 = vunpack.c.h.bf16 %v395
  %v449 = vunpack.c.l.bf16 %v396
  %v450 = vunpack.c.h.bf16 %v396
  %v451 = vunpack.c.l.bf16 %v397
  %v452 = vunpack.c.h.bf16 %v397
  %v453 = vunpack.c.l.bf16 %v398
  %v454 = vunpack.c.h.bf16 %v398
  %v455 = vunpack.c.l.bf16 %v399
  %v456 = vunpack.c.h.bf16 %v399
  %v457 = vunpack.c.l.bf16 %v400
  %v458 = vunpack.c.h.bf16 %v400
  %v459 = vunpack.c.l.bf16 %v401
  %v460 = vunpack.c.h.bf16 %v401
  %v461 = vunpack.c.l.bf16 %v402
  %v462 = vunpack.c.h.bf16 %v402
  %v463 = vunpack.c.l.bf16 %v403
  %v464 = vunpack.c.h.bf16 %v403
  %v465 = vunpack.c.l.bf16 %v404
  %v466 = vunpack.c.h.bf16 %v404
  %v467 = vunpack.c.l.bf16 %v405
  %v468 = vunpack.c.h.bf16 %v405
  %v469 = vunpack.c.l.bf16 %v406
  %v470 = vunpack.c.h.bf16 %v406
  %v471 = vunpack.c.l.bf16 %v407
  %v472 = vunpack.c.h.bf16 %v407
  %v473 = vunpack.c.l.bf16 %v408
  %v474 = vunpack.c.h.bf16 %v408
  %v475 = vunpack.c.l.bf16 %v409
  %v476 = vunpack.c.h.bf16 %v409
  %v477 = vunpack.c.l.bf16 %v410
  %v478 = vunpack.c.h.bf16 %v410
  %v479 = vunpack.c.l.bf16 %v411
  %v480 = vunpack.c.h.bf16 %v411
  %v481 = vunpack.c.l.bf16 %v412
  %v482 = vunpack.c.h.bf16 %v412
  %v483 = vunpack.c.l.bf16 %v413
  %v484 = vunpack.c.h.bf16 %v413
  %v485 = vunpack.c.l.bf16 %v414
  %v486 = vunpack.c.h.bf16 %v414
  %v488 = vsel %vm222, %v378, 0
  %490 = vmatprep.subr.mxu0 %v416
  %491 = vmatpush1.msra.mxu0 %v415
  %492 = vmatprep.subr.mxu0 %v434
  %493 = vmatpush1.msra.mxu0 %v433
  %494 = vmatprep.subr.mxu0 %v452
  %495 = vmatpush1.msra.mxu0 %v451
  %496 = vmatprep.subr.mxu0 %v470
  %497 = vmatpush1.msra.mxu0 %v469
  %498 = vmatprep.subr.mxu0 0.0
  %499 = vmatpush1.msra.mxu0 0.0
  %500 = vmatprep.subr.mxu0 0.0
  %501 = vmatpush1.msra.mxu0 0.0
  %502 = vmatprep.subr.mxu0 0.0
  %503 = vmatpush1.msra.mxu0 0.0
  %504 = vmatprep.subr.mxu0 0.0
  %505 = vmatpush1.msra.mxu0 0.0
  %506 = vmatprep.subr.mxu0 0.0
  %507 = vmatpush1.msra.mxu0 0.0
  %508 = vmatprep.subr.mxu0 0.0
  %509 = vmatpush1.msra.mxu0 0.0
  %510 = vmatprep.subr.mxu0 0.0
  %511 = vmatpush1.msra.mxu0 0.0
  %512 = vmatprep.subr.mxu0 0.0
  %513 = vmatpush1.msra.mxu0 0.0
  %514 = vmatprep.subr.mxu0 0.0
  %515 = vmatpush1.msra.mxu0 0.0
  %516 = vmatprep.subr.mxu0 0.0
  %517 = vmatpush1.msra.mxu0 0.0
  %518 = vmatprep.subr.mxu0 0.0
  %519 = vmatpush1.msra.mxu0 0.0
  %520 = vmatprep.subr.mxu0 0.0
  %521 = vmatpush1.msra.mxu0 0.0
  %522 = vmatprep.subr.mxu0 0.0
  %523 = vmatpush1.msra.mxu0 0.0
  %524 = vmatprep.subr.mxu0 0.0
  %525 = vmatpush1.msra.mxu0 0.0
  %526 = vmatprep.subr.mxu0 0.0
  %527 = vmatpush1.msra.mxu0 0.0
  %528 = vmatprep.subr.mxu0 0.0
  %529 = vmatpush1.msra.mxu0 0.0
  %530 = vmatprep.subr.mxu0 0.0
  %531 = vmatpush1.msra.mxu0 0.0
  %532 = vmatprep.subr.mxu0 0.0
  %533 = vmatpush1.msra.mxu0 0.0
  %534 = vmatprep.subr.mxu0 0.0
  %535 = vmatpush1.msra.mxu0 0.0
  %536 = vmatprep.subr.mxu0 0.0
  %537 = vmatpush1.msra.mxu0 0.0
  %538 = vmatprep.subr.mxu0 0.0
  %539 = vmatpush1.msra.mxu0 0.0
  %540 = vmatprep.subr.mxu0 0.0
  %541 = vmatpush1.msra.mxu0 0.0
  %542 = vmatprep.subr.mxu0 0.0
  %543 = vmatpush1.msra.mxu0 0.0
  %544 = vmatprep.subr.mxu0 0.0
  %545 = vmatpush1.msra.mxu0 0.0
  %546 = vmatprep.subr.mxu0 0.0
  %547 = vmatpush1.msra.mxu0 0.0
  %548 = vmatprep.subr.mxu0 0.0
  %549 = vmatpush1.msra.mxu0 0.0
  %550 = vmatprep.subr.mxu0 0.0
  %551 = vmatpush1.msra.mxu0 0.0
  %552 = vmatprep.subr.mxu0 0.0
  %553 = vmatpush1.msra.mxu0 0.0
  %554 = vmatprep.mubr.f32.mxu0 0.0
  %555 = vmatmul.mubr.f32.gmra.mrb[0].mxu0 %v488
  %v556 = vpop.f32.mrb[0].mxu0
  %v557 = vadd.f32 0.0, %v556
  %v558 = vpop.f32.mrb[0].mxu0
  %v559 = vadd.f32 0.0, %v558
  %560 = vdwg.mxu0
  %561 = vmatprep.subr.mxu0 %v418
  %562 = vmatpush1.msra.mxu0 %v417
  %563 = vmatprep.subr.mxu0 %v436
  %564 = vmatpush1.msra.mxu0 %v435
  %565 = vmatprep.subr.mxu0 %v454
  %566 = vmatpush1.msra.mxu0 %v453
  %567 = vmatprep.subr.mxu0 %v472
  %568 = vmatpush1.msra.mxu0 %v471
  %569 = vmatprep.subr.mxu0 0.0
  %570 = vmatpush1.msra.mxu0 0.0
  %571 = vmatprep.subr.mxu0 0.0
  %572 = vmatpush1.msra.mxu0 0.0
  %573 = vmatprep.subr.mxu0 0.0
  %574 = vmatpush1.msra.mxu0 0.0
  %575 = vmatprep.subr.mxu0 0.0
  %576 = vmatpush1.msra.mxu0 0.0
  %577 = vmatprep.subr.mxu0 0.0
  %578 = vmatpush1.msra.mxu0 0.0
  %579 = vmatprep.subr.mxu0 0.0
  %580 = vmatpush1.msra.mxu0 0.0
  %581 = vmatprep.subr.mxu0 0.0
  %582 = vmatpush1.msra.mxu0 0.0
  %583 = vmatprep.subr.mxu0 0.0
  %584 = vmatpush1.msra.mxu0 0.0
  %585 = vmatprep.subr.mxu0 0.0
  %586 = vmatpush1.msra.mxu0 0.0
  %587 = vmatprep.subr.mxu0 0.0
  %588 = vmatpush1.msra.mxu0 0.0
  %589 = vmatprep.subr.mxu0 0.0
  %590 = vmatpush1.msra.mxu0 0.0
  %591 = vmatprep.subr.mxu0 0.0
  %592 = vmatpush1.msra.mxu0 0.0
  %593 = vmatprep.subr.mxu0 0.0
  %594 = vmatpush1.msra.mxu0 0.0
  %595 = vmatprep.subr.mxu0 0.0
  %596 = vmatpush1.msra.mxu0 0.0
  %597 = vmatprep.subr.mxu0 0.0
  %598 = vmatpush1.msra.mxu0 0.0
  %599 = vmatprep.subr.mxu0 0.0
  %600 = vmatpush1.msra.mxu0 0.0
  %601 = vmatprep.subr.mxu0 0.0
  %602 = vmatpush1.msra.mxu0 0.0
  %603 = vmatprep.subr.mxu0 0.0
  %604 = vmatpush1.msra.mxu0 0.0
  %605 = vmatprep.subr.mxu0 0.0
  %606 = vmatpush1.msra.mxu0 0.0
  %607 = vmatprep.subr.mxu0 0.0
  %608 = vmatpush1.msra.mxu0 0.0
  %609 = vmatprep.subr.mxu0 0.0
  %610 = vmatpush1.msra.mxu0 0.0
  %611 = vmatprep.subr.mxu0 0.0
  %612 = vmatpush1.msra.mxu0 0.0
  %613 = vmatprep.subr.mxu0 0.0
  %614 = vmatpush1.msra.mxu0 0.0
  %615 = vmatprep.subr.mxu0 0.0
  %616 = vmatpush1.msra.mxu0 0.0
  %617 = vmatprep.subr.mxu0 0.0
  %618 = vmatpush1.msra.mxu0 0.0
  %619 = vmatprep.subr.mxu0 0.0
  %620 = vmatpush1.msra.mxu0 0.0
  %621 = vmatprep.subr.mxu0 0.0
  %622 = vmatpush1.msra.mxu0 0.0
  %623 = vmatprep.subr.mxu0 0.0
  %624 = vmatpush1.msra.mxu0 0.0
  %625 = vmatprep.mubr.f32.mxu0 0.0
  %626 = vmatmul.mubr.f32.gmra.mrb[0].mxu0 %v488
  %v627 = vpop.f32.mrb[0].mxu0
  %v628 = vadd.f32 0.0, %v627
  %v629 = vpop.f32.mrb[0].mxu0
  %v630 = vadd.f32 0.0, %v629
  %631 = vdwg.mxu0
  %632 = vmatprep.subr.mxu0 %v420
  %633 = vmatpush1.msra.mxu0 %v419
  %634 = vmatprep.subr.mxu0 %v438
  %635 = vmatpush1.msra.mxu0 %v437
  %636 = vmatprep.subr.mxu0 %v456
  %637 = vmatpush1.msra.mxu0 %v455
  %638 = vmatprep.subr.mxu0 %v474
  %639 = vmatpush1.msra.mxu0 %v473
  %640 = vmatprep.subr.mxu0 0.0
  %641 = vmatpush1.msra.mxu0 0.0
  %642 = vmatprep.subr.mxu0 0.0
  %643 = vmatpush1.msra.mxu0 0.0
  %644 = vmatprep.subr.mxu0 0.0
  %645 = vmatpush1.msra.mxu0 0.0
  %646 = vmatprep.subr.mxu0 0.0
  %647 = vmatpush1.msra.mxu0 0.0
  %648 = vmatprep.subr.mxu0 0.0
  %649 = vmatpush1.msra.mxu0 0.0
  %650 = vmatprep.subr.mxu0 0.0
  %651 = vmatpush1.msra.mxu0 0.0
  %652 = vmatprep.subr.mxu0 0.0
  %653 = vmatpush1.msra.mxu0 0.0
  %654 = vmatprep.subr.mxu0 0.0
  %655 = vmatpush1.msra.mxu0 0.0
  %656 = vmatprep.subr.mxu0 0.0
  %657 = vmatpush1.msra.mxu0 0.0
  %658 = vmatprep.subr.mxu0 0.0
  %659 = vmatpush1.msra.mxu0 0.0
  %660 = vmatprep.subr.mxu0 0.0
  %661 = vmatpush1.msra.mxu0 0.0
  %662 = vmatprep.subr.mxu0 0.0
  %663 = vmatpush1.msra.mxu0 0.0
  %664 = vmatprep.subr.mxu0 0.0
  %665 = vmatpush1.msra.mxu0 0.0
  %666 = vmatprep.subr.mxu0 0.0
  %667 = vmatpush1.msra.mxu0 0.0
  %668 = vmatprep.subr.mxu0 0.0
  %669 = vmatpush1.msra.mxu0 0.0
  %670 = vmatprep.subr.mxu0 0.0
  %671 = vmatpush1.msra.mxu0 0.0
  %672 = vmatprep.subr.mxu0 0.0
  %673 = vmatpush1.msra.mxu0 0.0
  %674 = vmatprep.subr.mxu0 0.0
  %675 = vmatpush1.msra.mxu0 0.0
  %676 = vmatprep.subr.mxu0 0.0
  %677 = vmatpush1.msra.mxu0 0.0
  %678 = vmatprep.subr.mxu0 0.0
  %679 = vmatpush1.msra.mxu0 0.0
  %680 = vmatprep.subr.mxu0 0.0
  %681 = vmatpush1.msra.mxu0 0.0
  %682 = vmatprep.subr.mxu0 0.0
  %683 = vmatpush1.msra.mxu0 0.0
  %684 = vmatprep.subr.mxu0 0.0
  %685 = vmatpush1.msra.mxu0 0.0
  %686 = vmatprep.subr.mxu0 0.0
  %687 = vmatpush1.msra.mxu0 0.0
  %688 = vmatprep.subr.mxu0 0.0
  %689 = vmatpush1.msra.mxu0 0.0
  %690 = vmatprep.subr.mxu0 0.0
  %691 = vmatpush1.msra.mxu0 0.0
  %692 = vmatprep.subr.mxu0 0.0
  %693 = vmatpush1.msra.mxu0 0.0
  %694 = vmatprep.subr.mxu0 0.0
  %695 = vmatpush1.msra.mxu0 0.0
  %696 = vmatprep.mubr.f32.mxu0 0.0
  %697 = vmatmul.mubr.f32.gmra.mrb[0].mxu0 %v488
  %v698 = vpop.f32.mrb[0].mxu0
  %v699 = vadd.f32 0.0, %v698
  %v700 = vpop.f32.mrb[0].mxu0
  %v701 = vadd.f32 0.0, %v700
  %702 = vdwg.mxu0
  %703 = vmatprep.subr.mxu0 %v422
  %704 = vmatpush1.msra.mxu0 %v421
  %705 = vmatprep.subr.mxu0 %v440
  %706 = vmatpush1.msra.mxu0 %v439
  %707 = vmatprep.subr.mxu0 %v458
  %708 = vmatpush1.msra.mxu0 %v457
  %709 = vmatprep.subr.mxu0 %v476
  %710 = vmatpush1.msra.mxu0 %v475
  %711 = vmatprep.subr.mxu0 0.0
  %712 = vmatpush1.msra.mxu0 0.0
  %713 = vmatprep.subr.mxu0 0.0
  %714 = vmatpush1.msra.mxu0 0.0
  %715 = vmatprep.subr.mxu0 0.0
  %716 = vmatpush1.msra.mxu0 0.0
  %717 = vmatprep.subr.mxu0 0.0
  %718 = vmatpush1.msra.mxu0 0.0
  %719 = vmatprep.subr.mxu0 0.0
  %720 = vmatpush1.msra.mxu0 0.0
  %721 = vmatprep.subr.mxu0 0.0
  %722 = vmatpush1.msra.mxu0 0.0
  %723 = vmatprep.subr.mxu0 0.0
  %724 = vmatpush1.msra.mxu0 0.0
  %725 = vmatprep.subr.mxu0 0.0
  %726 = vmatpush1.msra.mxu0 0.0
  %727 = vmatprep.subr.mxu0 0.0
  %728 = vmatpush1.msra.mxu0 0.0
  %729 = vmatprep.subr.mxu0 0.0
  %730 = vmatpush1.msra.mxu0 0.0
  %731 = vmatprep.subr.mxu0 0.0
  %732 = vmatpush1.msra.mxu0 0.0
  %733 = vmatprep.subr.mxu0 0.0
  %734 = vmatpush1.msra.mxu0 0.0
  %735 = vmatprep.subr.mxu0 0.0
  %736 = vmatpush1.msra.mxu0 0.0
  %737 = vmatprep.subr.mxu0 0.0
  %738 = vmatpush1.msra.mxu0 0.0
  %739 = vmatprep.subr.mxu0 0.0
  %740 = vmatpush1.msra.mxu0 0.0
  %741 = vmatprep.subr.mxu0 0.0
  %742 = vmatpush1.msra.mxu0 0.0
  %743 = vmatprep.subr.mxu0 0.0
  %744 = vmatpush1.msra.mxu0 0.0
  %745 = vmatprep.subr.mxu0 0.0
  %746 = vmatpush1.msra.mxu0 0.0
  %747 = vmatprep.subr.mxu0 0.0
  %748 = vmatpush1.msra.mxu0 0.0
  %749 = vmatprep.subr.mxu0 0.0
  %750 = vmatpush1.msra.mxu0 0.0
  %751 = vmatprep.subr.mxu0 0.0
  %752 = vmatpush1.msra.mxu0 0.0
  %753 = vmatprep.subr.mxu0 0.0
  %754 = vmatpush1.msra.mxu0 0.0
  %755 = vmatprep.subr.mxu0 0.0
  %756 = vmatpush1.msra.mxu0 0.0
  %757 = vmatprep.subr.mxu0 0.0
  %758 = vmatpush1.msra.mxu0 0.0
  %759 = vmatprep.subr.mxu0 0.0
  %760 = vmatpush1.msra.mxu0 0.0
  %761 = vmatprep.subr.mxu0 0.0
  %762 = vmatpush1.msra.mxu0 0.0
  %763 = vmatprep.subr.mxu0 0.0
  %764 = vmatpush1.msra.mxu0 0.0
  %765 = vmatprep.subr.mxu0 0.0
  %766 = vmatpush1.msra.mxu0 0.0
  %767 = vmatprep.mubr.f32.mxu0 0.0
  %768 = vmatmul.mubr.f32.gmra.mrb[0].mxu0 %v488
  %v769 = vpop.f32.mrb[0].mxu0
  %v770 = vadd.f32 0.0, %v769
  %v771 = vpop.f32.mrb[0].mxu0
  %v772 = vadd.f32 0.0, %v771
  %773 = vdwg.mxu0
  %774 = vmatprep.subr.mxu0 %v424
  %775 = vmatpush1.msra.mxu0 %v423
  %776 = vmatprep.subr.mxu0 %v442
  %777 = vmatpush1.msra.mxu0 %v441
  %778 = vmatprep.subr.mxu0 %v460
  %779 = vmatpush1.msra.mxu0 %v459
  %780 = vmatprep.subr.mxu0 %v478
  %781 = vmatpush1.msra.mxu0 %v477
  %782 = vmatprep.subr.mxu0 0.0
  %783 = vmatpush1.msra.mxu0 0.0
  %784 = vmatprep.subr.mxu0 0.0
  %785 = vmatpush1.msra.mxu0 0.0
  %786 = vmatprep.subr.mxu0 0.0
  %787 = vmatpush1.msra.mxu0 0.0
  %788 = vmatprep.subr.mxu0 0.0
  %789 = vmatpush1.msra.mxu0 0.0
  %790 = vmatprep.subr.mxu0 0.0
  %791 = vmatpush1.msra.mxu0 0.0
  %792 = vmatprep.subr.mxu0 0.0
  %793 = vmatpush1.msra.mxu0 0.0
  %794 = vmatprep.subr.mxu0 0.0
  %795 = vmatpush1.msra.mxu0 0.0
  %796 = vmatprep.subr.mxu0 0.0
  %797 = vmatpush1.msra.mxu0 0.0
  %798 = vmatprep.subr.mxu0 0.0
  %799 = vmatpush1.msra.mxu0 0.0
  %800 = vmatprep.subr.mxu0 0.0
  %801 = vmatpush1.msra.mxu0 0.0
  %802 = vmatprep.subr.mxu0 0.0
  %803 = vmatpush1.msra.mxu0 0.0
  %804 = vmatprep.subr.mxu0 0.0
  %805 = vmatpush1.msra.mxu0 0.0
  %806 = vmatprep.subr.mxu0 0.0
  %807 = vmatpush1.msra.mxu0 0.0
  %808 = vmatprep.subr.mxu0 0.0
  %809 = vmatpush1.msra.mxu0 0.0
  %810 = vmatprep.subr.mxu0 0.0
  %811 = vmatpush1.msra.mxu0 0.0
  %812 = vmatprep.subr.mxu0 0.0
  %813 = vmatpush1.msra.mxu0 0.0
  %814 = vmatprep.subr.mxu0 0.0
  %815 = vmatpush1.msra.mxu0 0.0
  %816 = vmatprep.subr.mxu0 0.0
  %817 = vmatpush1.msra.mxu0 0.0
  %818 = vmatprep.subr.mxu0 0.0
  %819 = vmatpush1.msra.mxu0 0.0
  %820 = vmatprep.subr.mxu0 0.0
  %821 = vmatpush1.msra.mxu0 0.0
  %822 = vmatprep.subr.mxu0 0.0
  %823 = vmatpush1.msra.mxu0 0.0
  %824 = vmatprep.subr.mxu0 0.0
  %825 = vmatpush1.msra.mxu0 0.0
  %826 = vmatprep.subr.mxu0 0.0
  %827 = vmatpush1.msra.mxu0 0.0
  %828 = vmatprep.subr.mxu0 0.0
  %829 = vmatpush1.msra.mxu0 0.0
  %830 = vmatprep.subr.mxu0 0.0
  %831 = vmatpush1.msra.mxu0 0.0
  %832 = vmatprep.subr.mxu0 0.0
  %833 = vmatpush1.msra.mxu0 0.0
  %834 = vmatprep.subr.mxu0 0.0
  %835 = vmatpush1.msra.mxu0 0.0
  %836 = vmatprep.subr.mxu0 0.0
  %837 = vmatpush1.msra.mxu0 0.0
  %838 = vmatprep.mubr.f32.mxu0 0.0
  %839 = vmatmul.mubr.f32.gmra.mrb[0].mxu0 %v488
  %v840 = vpop.f32.mrb[0].mxu0
  %v841 = vadd.f32 0.0, %v840
  %v842 = vpop.f32.mrb[0].mxu0
  %v843 = vadd.f32 0.0, %v842
  %844 = vdwg.mxu0
  %845 = vmatprep.subr.mxu0 %v426
  %846 = vmatpush1.msra.mxu0 %v425
  %847 = vmatprep.subr.mxu0 %v444
  %848 = vmatpush1.msra.mxu0 %v443
  %849 = vmatprep.subr.mxu0 %v462
  %850 = vmatpush1.msra.mxu0 %v461
  %851 = vmatprep.subr.mxu0 %v480
  %852 = vmatpush1.msra.mxu0 %v479
  %853 = vmatprep.subr.mxu0 0.0
  %854 = vmatpush1.msra.mxu0 0.0
  %855 = vmatprep.subr.mxu0 0.0
  %856 = vmatpush1.msra.mxu0 0.0
  %857 = vmatprep.subr.mxu0 0.0
  %858 = vmatpush1.msra.mxu0 0.0
  %859 = vmatprep.subr.mxu0 0.0
  %860 = vmatpush1.msra.mxu0 0.0
  %861 = vmatprep.subr.mxu0 0.0
  %862 = vmatpush1.msra.mxu0 0.0
  %863 = vmatprep.subr.mxu0 0.0
  %864 = vmatpush1.msra.mxu0 0.0
  %865 = vmatprep.subr.mxu0 0.0
  %866 = vmatpush1.msra.mxu0 0.0
  %867 = vmatprep.subr.mxu0 0.0
  %868 = vmatpush1.msra.mxu0 0.0
  %869 = vmatprep.subr.mxu0 0.0
  %870 = vmatpush1.msra.mxu0 0.0
  %871 = vmatprep.subr.mxu0 0.0
  %872 = vmatpush1.msra.mxu0 0.0
  %873 = vmatprep.subr.mxu0 0.0
  %874 = vmatpush1.msra.mxu0 0.0
  %875 = vmatprep.subr.mxu0 0.0
  %876 = vmatpush1.msra.mxu0 0.0
  %877 = vmatprep.subr.mxu0 0.0
  %878 = vmatpush1.msra.mxu0 0.0
  %879 = vmatprep.subr.mxu0 0.0
  %880 = vmatpush1.msra.mxu0 0.0
  %881 = vmatprep.subr.mxu0 0.0
  %882 = vmatpush1.msra.mxu0 0.0
  %883 = vmatprep.subr.mxu0 0.0
  %884 = vmatpush1.msra.mxu0 0.0
  %885 = vmatprep.subr.mxu0 0.0
  %886 = vmatpush1.msra.mxu0 0.0
  %887 = vmatprep.subr.mxu0 0.0
  %888 = vmatpush1.msra.mxu0 0.0
  %889 = vmatprep.subr.mxu0 0.0
  %890 = vmatpush1.msra.mxu0 0.0
  %891 = vmatprep.subr.mxu0 0.0
  %892 = vmatpush1.msra.mxu0 0.0
  %893 = vmatprep.subr.mxu0 0.0
  %894 = vmatpush1.msra.mxu0 0.0
  %895 = vmatprep.subr.mxu0 0.0
  %896 = vmatpush1.msra.mxu0 0.0
  %897 = vmatprep.subr.mxu0 0.0
  %898 = vmatpush1.msra.mxu0 0.0
  %899 = vmatprep.subr.mxu0 0.0
  %900 = vmatpush1.msra.mxu0 0.0
  %901 = vmatprep.subr.mxu0 0.0
  %902 = vmatpush1.msra.mxu0 0.0
  %903 = vmatprep.subr.mxu0 0.0
  %904 = vmatpush1.msra.mxu0 0.0
  %905 = vmatprep.subr.mxu0 0.0
  %906 = vmatpush1.msra.mxu0 0.0
  %907 = vmatprep.subr.mxu0 0.0
  %908 = vmatpush1.msra.mxu0 0.0
  %909 = vmatprep.mubr.f32.mxu0 0.0
  %910 = vmatmul.mubr.f32.gmra.mrb[0].mxu0 %v488
  %v911 = vpop.f32.mrb[0].mxu0
  %v912 = vadd.f32 0.0, %v911
  %v913 = vpop.f32.mrb[0].mxu0
  %v914 = vadd.f32 0.0, %v913
  %915 = vdwg.mxu0
  %916 = vmatprep.subr.mxu0 %v428
  %917 = vmatpush1.msra.mxu0 %v427
  %918 = vmatprep.subr.mxu0 %v446
  %919 = vmatpush1.msra.mxu0 %v445
  %920 = vmatprep.subr.mxu0 %v464
  %921 = vmatpush1.msra.mxu0 %v463
  %922 = vmatprep.subr.mxu0 %v482
  %923 = vmatpush1.msra.mxu0 %v481
  %924 = vmatprep.subr.mxu0 0.0
  %925 = vmatpush1.msra.mxu0 0.0
  %926 = vmatprep.subr.mxu0 0.0
  %927 = vmatpush1.msra.mxu0 0.0
  %928 = vmatprep.subr.mxu0 0.0
  %929 = vmatpush1.msra.mxu0 0.0
  %930 = vmatprep.subr.mxu0 0.0
  %931 = vmatpush1.msra.mxu0 0.0
  %932 = vmatprep.subr.mxu0 0.0
  %933 = vmatpush1.msra.mxu0 0.0
  %934 = vmatprep.subr.mxu0 0.0
  %935 = vmatpush1.msra.mxu0 0.0
  %936 = vmatprep.subr.mxu0 0.0
  %937 = vmatpush1.msra.mxu0 0.0
  %938 = vmatprep.subr.mxu0 0.0
  %939 = vmatpush1.msra.mxu0 0.0
  %940 = vmatprep.subr.mxu0 0.0
  %941 = vmatpush1.msra.mxu0 0.0
  %942 = vmatprep.subr.mxu0 0.0
  %943 = vmatpush1.msra.mxu0 0.0
  %944 = vmatprep.subr.mxu0 0.0
  %945 = vmatpush1.msra.mxu0 0.0
  %946 = vmatprep.subr.mxu0 0.0
  %947 = vmatpush1.msra.mxu0 0.0
  %948 = vmatprep.subr.mxu0 0.0
  %949 = vmatpush1.msra.mxu0 0.0
  %950 = vmatprep.subr.mxu0 0.0
  %951 = vmatpush1.msra.mxu0 0.0
  %952 = vmatprep.subr.mxu0 0.0
  %953 = vmatpush1.msra.mxu0 0.0
  %954 = vmatprep.subr.mxu0 0.0
  %955 = vmatpush1.msra.mxu0 0.0
  %956 = vmatprep.subr.mxu0 0.0
  %957 = vmatpush1.msra.mxu0 0.0
  %958 = vmatprep.subr.mxu0 0.0
  %959 = vmatpush1.msra.mxu0 0.0
  %960 = vmatprep.subr.mxu0 0.0
  %961 = vmatpush1.msra.mxu0 0.0
  %962 = vmatprep.subr.mxu0 0.0
  %963 = vmatpush1.msra.mxu0 0.0
  %964 = vmatprep.subr.mxu0 0.0
  %965 = vmatpush1.msra.mxu0 0.0
  %966 = vmatprep.subr.mxu0 0.0
  %967 = vmatpush1.msra.mxu0 0.0
  %968 = vmatprep.subr.mxu0 0.0
  %969 = vmatpush1.msra.mxu0 0.0
  %970 = vmatprep.subr.mxu0 0.0
  %971 = vmatpush1.msra.mxu0 0.0
  %972 = vmatprep.subr.mxu0 0.0
  %973 = vmatpush1.msra.mxu0 0.0
  %974 = vmatprep.subr.mxu0 0.0
  %975 = vmatpush1.msra.mxu0 0.0
  %976 = vmatprep.subr.mxu0 0.0
  %977 = vmatpush1.msra.mxu0 0.0
  %978 = vmatprep.subr.mxu0 0.0
  %979 = vmatpush1.msra.mxu0 0.0
  %980 = vmatprep.mubr.f32.mxu0 0.0
  %981 = vmatmul.mubr.f32.gmra.mrb[0].mxu0 %v488
  %v982 = vpop.f32.mrb[0].mxu0
  %v983 = vadd.f32 0.0, %v982
  %v984 = vpop.f32.mrb[0].mxu0
  %v985 = vadd.f32 0.0, %v984
  %986 = vdwg.mxu0
  %987 = vmatprep.subr.mxu0 %v430
  %988 = vmatpush1.msra.mxu0 %v429
  %989 = vmatprep.subr.mxu0 %v448
  %990 = vmatpush1.msra.mxu0 %v447
  %991 = vmatprep.subr.mxu0 %v466
  %992 = vmatpush1.msra.mxu0 %v465
  %993 = vmatprep.subr.mxu0 %v484
  %994 = vmatpush1.msra.mxu0 %v483
  %995 = vmatprep.subr.mxu0 0.0
  %996 = vmatpush1.msra.mxu0 0.0
  %997 = vmatprep.subr.mxu0 0.0
  %998 = vmatpush1.msra.mxu0 0.0
  %999 = vmatprep.subr.mxu0 0.0
  %1000 = vmatpush1.msra.mxu0 0.0
  %1001 = vmatprep.subr.mxu0 0.0
  %1002 = vmatpush1.msra.mxu0 0.0
  %1003 = vmatprep.subr.mxu0 0.0
  %1004 = vmatpush1.msra.mxu0 0.0
  %1005 = vmatprep.subr.mxu0 0.0
  %1006 = vmatpush1.msra.mxu0 0.0
  %1007 = vmatprep.subr.mxu0 0.0
  %1008 = vmatpush1.msra.mxu0 0.0
  %1009 = vmatprep.subr.mxu0 0.0
  %1010 = vmatpush1.msra.mxu0 0.0
  %1011 = vmatprep.subr.mxu0 0.0
  %1012 = vmatpush1.msra.mxu0 0.0
  %1013 = vmatprep.subr.mxu0 0.0
  %1014 = vmatpush1.msra.mxu0 0.0
  %1015 = vmatprep.subr.mxu0 0.0
  %1016 = vmatpush1.msra.mxu0 0.0
  %1017 = vmatprep.subr.mxu0 0.0
  %1018 = vmatpush1.msra.mxu0 0.0
  %1019 = vmatprep.subr.mxu0 0.0
  %1020 = vmatpush1.msra.mxu0 0.0
  %1021 = vmatprep.subr.mxu0 0.0
  %1022 = vmatpush1.msra.mxu0 0.0
  %1023 = vmatprep.subr.mxu0 0.0
  %1024 = vmatpush1.msra.mxu0 0.0
  %1025 = vmatprep.subr.mxu0 0.0
  %1026 = vmatpush1.msra.mxu0 0.0
  %1027 = vmatprep.subr.mxu0 0.0
  %1028 = vmatpush1.msra.mxu0 0.0
  %1029 = vmatprep.subr.mxu0 0.0
  %1030 = vmatpush1.msra.mxu0 0.0
  %1031 = vmatprep.subr.mxu0 0.0
  %1032 = vmatpush1.msra.mxu0 0.0
  %1033 = vmatprep.subr.mxu0 0.0
  %1034 = vmatpush1.msra.mxu0 0.0
  %1035 = vmatprep.subr.mxu0 0.0
  %1036 = vmatpush1.msra.mxu0 0.0
  %1037 = vmatprep.subr.mxu0 0.0
  %1038 = vmatpush1.msra.mxu0 0.0
  %1039 = vmatprep.subr.mxu0 0.0
  %1040 = vmatpush1.msra.mxu0 0.0
  %1041 = vmatprep.subr.mxu0 0.0
  %1042 = vmatpush1.msra.mxu0 0.0
  %1043 = vmatprep.subr.mxu0 0.0
  %1044 = vmatpush1.msra.mxu0 0.0
  %1045 = vmatprep.subr.mxu0 0.0
  %1046 = vmatpush1.msra.mxu0 0.0
  %1047 = vmatprep.subr.mxu0 0.0
  %1048 = vmatpush1.msra.mxu0 0.0
  %1049 = vmatprep.subr.mxu0 0.0
  %1050 = vmatpush1.msra.mxu0 0.0
  %1051 = vmatprep.mubr.f32.mxu0 0.0
  %1052 = vmatmul.mubr.f32.gmra.mrb[0].mxu0 %v488
  %v1053 = vpop.f32.mrb[0].mxu0
  %v1054 = vadd.f32 0.0, %v1053
  %v1055 = vpop.f32.mrb[0].mxu0
  %v1056 = vadd.f32 0.0, %v1055
  %1057 = vdwg.mxu0
  %1058 = vmatprep.subr.mxu0 %v432
  %1059 = vmatpush1.msra.mxu0 %v431
  %1060 = vmatprep.subr.mxu0 %v450
  %1061 = vmatpush1.msra.mxu0 %v449
  %1062 = vmatprep.subr.mxu0 %v468
  %1063 = vmatpush1.msra.mxu0 %v467
  %1064 = vmatprep.subr.mxu0 %v486
  %1065 = vmatpush1.msra.mxu0 %v485
  %1066 = vmatprep.subr.mxu0 0.0
  %1067 = vmatpush1.msra.mxu0 0.0
  %1068 = vmatprep.subr.mxu0 0.0
  %1069 = vmatpush1.msra.mxu0 0.0
  %1070 = vmatprep.subr.mxu0 0.0
  %1071 = vmatpush1.msra.mxu0 0.0
  %1072 = vmatprep.subr.mxu0 0.0
  %1073 = vmatpush1.msra.mxu0 0.0
  %1074 = vmatprep.subr.mxu0 0.0
  %1075 = vmatpush1.msra.mxu0 0.0
  %1076 = vmatprep.subr.mxu0 0.0
  %1077 = vmatpush1.msra.mxu0 0.0
  %1078 = vmatprep.subr.mxu0 0.0
  %1079 = vmatpush1.msra.mxu0 0.0
  %1080 = vmatprep.subr.mxu0 0.0
  %1081 = vmatpush1.msra.mxu0 0.0
  %1082 = vmatprep.subr.mxu0 0.0
  %1083 = vmatpush1.msra.mxu0 0.0
  %1084 = vmatprep.subr.mxu0 0.0
  %1085 = vmatpush1.msra.mxu0 0.0
  %1086 = vmatprep.subr.mxu0 0.0
  %1087 = vmatpush1.msra.mxu0 0.0
  %1088 = vmatprep.subr.mxu0 0.0
  %1089 = vmatpush1.msra.mxu0 0.0
  %1090 = vmatprep.subr.mxu0 0.0
  %1091 = vmatpush1.msra.mxu0 0.0
  %1092 = vmatprep.subr.mxu0 0.0
  %1093 = vmatpush1.msra.mxu0 0.0
  %1094 = vmatprep.subr.mxu0 0.0
  %1095 = vmatpush1.msra.mxu0 0.0
  %1096 = vmatprep.subr.mxu0 0.0
  %1097 = vmatpush1.msra.mxu0 0.0
  %1098 = vmatprep.subr.mxu0 0.0
  %1099 = vmatpush1.msra.mxu0 0.0
  %1100 = vmatprep.subr.mxu0 0.0
  %1101 = vmatpush1.msra.mxu0 0.0
  %1102 = vmatprep.subr.mxu0 0.0
  %1103 = vmatpush1.msra.mxu0 0.0
  %1104 = vmatprep.subr.mxu0 0.0
  %1105 = vmatpush1.msra.mxu0 0.0
  %1106 = vmatprep.subr.mxu0 0.0
  %1107 = vmatpush1.msra.mxu0 0.0
  %1108 = vmatprep.subr.mxu0 0.0
  %1109 = vmatpush1.msra.mxu0 0.0
  %1110 = vmatprep.subr.mxu0 0.0
  %1111 = vmatpush1.msra.mxu0 0.0
  %1112 = vmatprep.subr.mxu0 0.0
  %1113 = vmatpush1.msra.mxu0 0.0
  %1114 = vmatprep.subr.mxu0 0.0
  %1115 = vmatpush1.msra.mxu0 0.0
  %1116 = vmatprep.subr.mxu0 0.0
  %1117 = vmatpush1.msra.mxu0 0.0
  %1118 = vmatprep.subr.mxu0 0.0
  %1119 = vmatpush1.msra.mxu0 0.0
  %1120 = vmatprep.subr.mxu0 0.0
  %1121 = vmatpush1.msra.mxu0 0.0
  %1122 = vmatprep.mubr.f32.mxu0 0.0
  %1123 = vmatmul.mubr.f32.gmra.mrb[0].mxu0 %v488
  %v1124 = vpop.f32.mrb[0].mxu0
  %v1125 = vadd.f32 0.0, %v1124
  %v1126 = vpop.f32.mrb[0].mxu0
  %v1127 = vadd.f32 0.0, %v1126
  %1128 = vdwg.mxu0
  %v1129 = vmul.f32 %v557, %v770
  %v1130 = vmul.f32 %v559, %v772
  %v1131 = vmul.f32 %v628, %v841
  %v1132 = vmul.f32 %v630, %v843
  %v1133 = vmul.f32 %v699, %v912
  %v1134 = vmul.f32 %v701, %v914
  %v1135 = vmul.f32 %v1129, %v983
  %v1136 = vmul.f32 %v1130, %v985
  %v1137 = vmul.f32 %v1131, %v1054
  %v1138 = vmul.f32 %v1132, %v1056
  %v1139 = vmul.f32 %v1133, %v1125
  %v1140 = vmul.f32 %v1134, %v1127
  %v1141 = vld [vmem:[%s3] sm:$0xff]
  %v1142 = vld [vmem:[%s3 + $0x8] sm:$0xff]
  %v1143 = vld [vmem:[%s3 + $0x10] sm:$0xff]
  %v1144 = vld [vmem:[%s3 + $0x18] sm:$0xff]
  %v1145 = vld [vmem:[%s3 + $0x20] sm:$0xff]
  %v1146 = vld [vmem:[%s3 + $0x28] sm:$0xff]
  %v1147 = vld [vmem:[%s3 + $0x30] sm:$0xff]
  %v1148 = vld [vmem:[%s3 + $0x38] sm:$0xff]
  %v1149 = vld [vmem:[%s3 + $0x40] sm:$0xff]
  %v1150 = vld [vmem:[%s3 + $0x48] sm:$0xff]
  %v1151 = vld [vmem:[%s3 + $0x50] sm:$0xff]
  %v1152 = vld [vmem:[%s3 + $0x58] sm:$0xff]
  %v1153 = vld [vmem:[%s3 + $0x60] sm:$0xff]
  %v1154 = vld [vmem:[%s3 + $0x68] sm:$0xff]
  %v1155 = vld [vmem:[%s3 + $0x70] sm:$0xff]
  %v1156 = vld [vmem:[%s3 + $0x78] sm:$0xff]
  %v1157 = vld [vmem:[%s3 + $0x80] sm:$0xff]
  %v1158 = vld [vmem:[%s3 + $0x88] sm:$0xff]
  %v1159 = vld [vmem:[%s3 + $0x90] sm:$0xff]
  %v1160 = vld [vmem:[%s3 + $0x98] sm:$0xff]
  %v1161 = vld [vmem:[%s3 + $0xa0] sm:$0xff]
  %v1162 = vld [vmem:[%s3 + $0xa8] sm:$0xff]
  %v1163 = vld [vmem:[%s3 + $0xb0] sm:$0xff]
  %v1164 = vld [vmem:[%s3 + $0xb8] sm:$0xff]
  %v1165 = vld [vmem:[%s3 + $0xc0] sm:$0xff]
  %v1166 = vld [vmem:[%s3 + $0xc8] sm:$0xff]
  %v1167 = vld [vmem:[%s3 + $0xd0] sm:$0xff]
  %v1168 = vld [vmem:[%s3 + $0xd8] sm:$0xff]
  %v1169 = vld [vmem:[%s3 + $0xe0] sm:$0xff]
  %v1170 = vld [vmem:[%s3 + $0xe8] sm:$0xff]
  %v1171 = vld [vmem:[%s3 + $0xf0] sm:$0xff]
  %v1172 = vld [vmem:[%s3 + $0xf8] sm:$0xff]
  %v1173 = vld [vmem:[%s3 + $0x100] sm:$0xff]
  %v1174 = vld [vmem:[%s3 + $0x108] sm:$0xff]
  %v1175 = vld [vmem:[%s3 + $0x110] sm:$0xff]
  %v1176 = vld [vmem:[%s3 + $0x118] sm:$0xff]
  %v1177 = vld [vmem:[%s3 + $0x120] sm:$0xff]
  %v1178 = vld [vmem:[%s3 + $0x128] sm:$0xff]
  %v1179 = vld [vmem:[%s3 + $0x130] sm:$0xff]
  %v1180 = vld [vmem:[%s3 + $0x138] sm:$0xff]
  %v1181 = vld [vmem:[%s3 + $0x140] sm:$0xff]
  %v1182 = vld [vmem:[%s3 + $0x148] sm:$0xff]
  %v1183 = vld [vmem:[%s3 + $0x150] sm:$0xff]
  %v1184 = vld [vmem:[%s3 + $0x158] sm:$0xff]
  %v1185 = vld [vmem:[%s3 + $0x160] sm:$0xff]
  %v1186 = vld [vmem:[%s3 + $0x168] sm:$0xff]
  %v1187 = vld [vmem:[%s3 + $0x170] sm:$0xff]
  %v1188 = vld [vmem:[%s3 + $0x178] sm:$0xff]
  %v1189 = vld [vmem:[%s3 + $0x180] sm:$0xff]
  %v1190 = vld [vmem:[%s3 + $0x188] sm:$0xff]
  %v1191 = vld [vmem:[%s3 + $0x190] sm:$0xff]
  %v1192 = vld [vmem:[%s3 + $0x198] sm:$0xff]
  %v1193 = vld [vmem:[%s3 + $0x1a0] sm:$0xff]
  %v1194 = vld [vmem:[%s3 + $0x1a8] sm:$0xff]
  %v1195 = vld [vmem:[%s3 + $0x1b0] sm:$0xff]
  %v1196 = vld [vmem:[%s3 + $0x1b8] sm:$0xff]
  %v1197 = vld [vmem:[%s3 + $0x1c0] sm:$0xff]
  %v1198 = vld [vmem:[%s3 + $0x1c8] sm:$0xff]
  %v1199 = vld [vmem:[%s3 + $0x1d0] sm:$0xff]
  %v1200 = vld [vmem:[%s3 + $0x1d8] sm:$0xff]
  %v1201 = vld [vmem:[%s3 + $0x1e0] sm:$0xff]
  %v1202 = vld [vmem:[%s3 + $0x1e8] sm:$0xff]
  %v1203 = vld [vmem:[%s3 + $0x1f0] sm:$0xff]
  %v1204 = vld [vmem:[%s3 + $0x1f8] sm:$0xff]
  %v1205 = vld [vmem:[%s3 + $0x200] sm:$0xff]
  %v1206 = vld [vmem:[%s3 + $0x208] sm:$0xff]
  %v1207 = vld [vmem:[%s3 + $0x210] sm:$0xff]
  %v1208 = vld [vmem:[%s3 + $0x218] sm:$0xff]
  %v1209 = vld [vmem:[%s3 + $0x220] sm:$0xff]
  %v1210 = vld [vmem:[%s3 + $0x228] sm:$0xff]
  %v1211 = vld [vmem:[%s3 + $0x230] sm:$0xff]
  %v1212 = vld [vmem:[%s3 + $0x238] sm:$0xff]
  %v1213 = vld [vmem:[%s3 + $0x240] sm:$0xff]
  %v1214 = vld [vmem:[%s3 + $0x248] sm:$0xff]
  %v1215 = vld [vmem:[%s3 + $0x250] sm:$0xff]
  %v1216 = vld [vmem:[%s3 + $0x258] sm:$0xff]
  %v1217 = vld [vmem:[%s3 + $0x260] sm:$0xff]
  %v1218 = vld [vmem:[%s3 + $0x268] sm:$0xff]
  %v1219 = vld [vmem:[%s3 + $0x270] sm:$0xff]
  %v1220 = vld [vmem:[%s3 + $0x278] sm:$0xff]
  %v1221 = vld [vmem:[%s3 + $0x280] sm:$0xff]
  %v1222 = vld [vmem:[%s3 + $0x288] sm:$0xff]
  %v1223 = vld [vmem:[%s3 + $0x290] sm:$0xff]
  %v1224 = vld [vmem:[%s3 + $0x298] sm:$0xff]
  %v1225 = vld [vmem:[%s3 + $0x2a0] sm:$0xff]
  %v1226 = vld [vmem:[%s3 + $0x2a8] sm:$0xff]
  %v1227 = vld [vmem:[%s3 + $0x2b0] sm:$0xff]
  %v1228 = vld [vmem:[%s3 + $0x2b8] sm:$0xff]
  %v1229 = vld [vmem:[%s3 + $0x2c0] sm:$0xff]
  %v1230 = vld [vmem:[%s3 + $0x2c8] sm:$0xff]
  %v1231 = vld [vmem:[%s3 + $0x2d0] sm:$0xff]
  %v1232 = vld [vmem:[%s3 + $0x2d8] sm:$0xff]
  %v1233 = vld [vmem:[%s3 + $0x2e0] sm:$0xff]
  %v1234 = vld [vmem:[%s3 + $0x2e8] sm:$0xff]
  %v1235 = vld [vmem:[%s3 + $0x2f0] sm:$0xff]
  %v1236 = vld [vmem:[%s3 + $0x2f8] sm:$0xff]
  %v1237 = vlaneseq
  %v1238 = vshrl.u32 %v1237, 7
  %v1239 = vsub.s32 3, %v1238
  %v1240 = vrot.slane %v17, %v1239
  %1241 = vmatprep.subr.mxu0 0.0
  %1242 = vmatpush1.msra.mxu0 %v1141
  %1243 = vmatprep.subr.mxu0 0.0
  %1244 = vmatpush1.msra.mxu0 %v1142
  %1245 = vmatprep.subr.mxu0 0.0
  %1246 = vmatpush1.msra.mxu0 %v1143
  %1247 = vmatprep.subr.mxu0 0.0
  %1248 = vmatpush1.msra.mxu0 %v1144
  %1249 = vmatprep.subr.mxu0 0.0
  %1250 = vmatpush1.msra.mxu0 %v1145
  %1251 = vmatprep.subr.mxu0 0.0
  %1252 = vmatpush1.msra.mxu0 %v1146
  %1253 = vmatprep.subr.mxu0 0.0
  %1254 = vmatpush1.msra.mxu0 %v1147
  %1255 = vmatprep.subr.mxu0 0.0
  %1256 = vmatpush1.msra.mxu0 %v1148
  %1257 = vmatprep.subr.mxu0 0.0
  %1258 = vmatpush1.msra.mxu0 %v1149
  %1259 = vmatprep.subr.mxu0 0.0
  %1260 = vmatpush1.msra.mxu0 %v1150
  %1261 = vmatprep.subr.mxu0 0.0
  %1262 = vmatpush1.msra.mxu0 %v1151
  %1263 = vmatprep.subr.mxu0 0.0
  %1264 = vmatpush1.msra.mxu0 %v1152
  %1265 = vmatprep.subr.mxu0 0.0
  %1266 = vmatpush1.msra.mxu0 %v1153
  %1267 = vmatprep.subr.mxu0 0.0
  %1268 = vmatpush1.msra.mxu0 %v1154
  %1269 = vmatprep.subr.mxu0 0.0
  %1270 = vmatpush1.msra.mxu0 %v1155
  %1271 = vmatprep.subr.mxu0 0.0
  %1272 = vmatpush1.msra.mxu0 %v1156
  %1273 = vmatprep.subr.mxu0 0.0
  %1274 = vmatpush1.msra.mxu0 %v1157
  %1275 = vmatprep.subr.mxu0 0.0
  %1276 = vmatpush1.msra.mxu0 %v1158
  %1277 = vmatprep.subr.mxu0 0.0
  %1278 = vmatpush1.msra.mxu0 %v1159
  %1279 = vmatprep.subr.mxu0 0.0
  %1280 = vmatpush1.msra.mxu0 %v1160
  %1281 = vmatprep.subr.mxu0 0.0
  %1282 = vmatpush1.msra.mxu0 %v1161
  %1283 = vmatprep.subr.mxu0 0.0
  %1284 = vmatpush1.msra.mxu0 %v1162
  %1285 = vmatprep.subr.mxu0 0.0
  %1286 = vmatpush1.msra.mxu0 %v1163
  %1287 = vmatprep.subr.mxu0 0.0
  %1288 = vmatpush1.msra.mxu0 %v1164
  %1289 = vmatprep.subr.mxu0 0.0
  %1290 = vmatpush1.msra.mxu0 %v1165
  %1291 = vmatprep.subr.mxu0 0.0
  %1292 = vmatpush1.msra.mxu0 %v1166
  %1293 = vmatprep.subr.mxu0 0.0
  %1294 = vmatpush1.msra.mxu0 %v1167
  %1295 = vmatprep.subr.mxu0 0.0
  %1296 = vmatpush1.msra.mxu0 %v1168
  %1297 = vmatprep.subr.mxu0 0.0
  %1298 = vmatpush1.msra.mxu0 %v1169
  %1299 = vmatprep.subr.mxu0 0.0
  %1300 = vmatpush1.msra.mxu0 %v1170
  %1301 = vmatprep.subr.mxu0 0.0
  %1302 = vmatpush1.msra.mxu0 %v1171
  %1303 = vmatprep.subr.mxu0 0.0
  %1304 = vmatpush1.msra.mxu0 %v1172
  %1305 = vmatprep.mubr.f32.mxu0 %v1136
  %1306 = vmatmul.mubr.f32.gmra.mrb[0].mxu0 %v1135
  %v1307 = vpop.f32.mrb[0].mxu0
  %v1308 = vadd.f32 %v1240, %v1307
  %v1309 = vpop.f32.mrb[0].mxu0
  %1310 = vdwg.mxu0
  %1311 = vmatprep.subr.mxu0 0.0
  %1312 = vmatpush1.msra.mxu0 %v1173
  %1313 = vmatprep.subr.mxu0 0.0
  %1314 = vmatpush1.msra.mxu0 %v1174
  %1315 = vmatprep.subr.mxu0 0.0
  %1316 = vmatpush1.msra.mxu0 %v1175
  %1317 = vmatprep.subr.mxu0 0.0
  %1318 = vmatpush1.msra.mxu0 %v1176
  %1319 = vmatprep.subr.mxu0 0.0
  %1320 = vmatpush1.msra.mxu0 %v1177
  %1321 = vmatprep.subr.mxu0 0.0
  %1322 = vmatpush1.msra.mxu0 %v1178
  %1323 = vmatprep.subr.mxu0 0.0
  %1324 = vmatpush1.msra.mxu0 %v1179
  %1325 = vmatprep.subr.mxu0 0.0
  %1326 = vmatpush1.msra.mxu0 %v1180
  %1327 = vmatprep.subr.mxu0 0.0
  %1328 = vmatpush1.msra.mxu0 %v1181
  %1329 = vmatprep.subr.mxu0 0.0
  %1330 = vmatpush1.msra.mxu0 %v1182
  %1331 = vmatprep.subr.mxu0 0.0
  %1332 = vmatpush1.msra.mxu0 %v1183
  %1333 = vmatprep.subr.mxu0 0.0
  %1334 = vmatpush1.msra.mxu0 %v1184
  %1335 = vmatprep.subr.mxu0 0.0
  %1336 = vmatpush1.msra.mxu0 %v1185
  %1337 = vmatprep.subr.mxu0 0.0
  %1338 = vmatpush1.msra.mxu0 %v1186
  %1339 = vmatprep.subr.mxu0 0.0
  %1340 = vmatpush1.msra.mxu0 %v1187
  %1341 = vmatprep.subr.mxu0 0.0
  %1342 = vmatpush1.msra.mxu0 %v1188
  %1343 = vmatprep.subr.mxu0 0.0
  %1344 = vmatpush1.msra.mxu0 %v1189
  %1345 = vmatprep.subr.mxu0 0.0
  %1346 = vmatpush1.msra.mxu0 %v1190
  %1347 = vmatprep.subr.mxu0 0.0
  %1348 = vmatpush1.msra.mxu0 %v1191
  %1349 = vmatprep.subr.mxu0 0.0
  %1350 = vmatpush1.msra.mxu0 %v1192
  %1351 = vmatprep.subr.mxu0 0.0
  %1352 = vmatpush1.msra.mxu0 %v1193
  %1353 = vmatprep.subr.mxu0 0.0
  %1354 = vmatpush1.msra.mxu0 %v1194
  %1355 = vmatprep.subr.mxu0 0.0
  %1356 = vmatpush1.msra.mxu0 %v1195
  %1357 = vmatprep.subr.mxu0 0.0
  %1358 = vmatpush1.msra.mxu0 %v1196
  %1359 = vmatprep.subr.mxu0 0.0
  %1360 = vmatpush1.msra.mxu0 %v1197
  %1361 = vmatprep.subr.mxu0 0.0
  %1362 = vmatpush1.msra.mxu0 %v1198
  %1363 = vmatprep.subr.mxu0 0.0
  %1364 = vmatpush1.msra.mxu0 %v1199
  %1365 = vmatprep.subr.mxu0 0.0
  %1366 = vmatpush1.msra.mxu0 %v1200
  %1367 = vmatprep.subr.mxu0 0.0
  %1368 = vmatpush1.msra.mxu0 %v1201
  %1369 = vmatprep.subr.mxu0 0.0
  %1370 = vmatpush1.msra.mxu0 %v1202
  %1371 = vmatprep.subr.mxu0 0.0
  %1372 = vmatpush1.msra.mxu0 %v1203
  %1373 = vmatprep.subr.mxu0 0.0
  %1374 = vmatpush1.msra.mxu0 %v1204
  %1375 = vmatprep.mubr.f32.mxu0 %v1138
  %1376 = vmatmul.mubr.f32.gmra.mrb[0].mxu0 %v1137
  %v1377 = vpop.f32.mrb[0].mxu0
  %v1378 = vadd.f32 %v1308, %v1377
  %v1379 = vpop.f32.mrb[0].mxu0
  %1380 = vdwg.mxu0
  %1381 = vmatprep.subr.mxu0 0.0
  %1382 = vmatpush1.msra.mxu0 %v1205
  %1383 = vmatprep.subr.mxu0 0.0
  %1384 = vmatpush1.msra.mxu0 %v1206
  %1385 = vmatprep.subr.mxu0 0.0
  %1386 = vmatpush1.msra.mxu0 %v1207
  %1387 = vmatprep.subr.mxu0 0.0
  %1388 = vmatpush1.msra.mxu0 %v1208
  %1389 = vmatprep.subr.mxu0 0.0
  %1390 = vmatpush1.msra.mxu0 %v1209
  %1391 = vmatprep.subr.mxu0 0.0
  %1392 = vmatpush1.msra.mxu0 %v1210
  %1393 = vmatprep.subr.mxu0 0.0
  %1394 = vmatpush1.msra.mxu0 %v1211
  %1395 = vmatprep.subr.mxu0 0.0
  %1396 = vmatpush1.msra.mxu0 %v1212
  %1397 = vmatprep.subr.mxu0 0.0
  %1398 = vmatpush1.msra.mxu0 %v1213
  %1399 = vmatprep.subr.mxu0 0.0
  %1400 = vmatpush1.msra.mxu0 %v1214
  %1401 = vmatprep.subr.mxu0 0.0
  %1402 = vmatpush1.msra.mxu0 %v1215
  %1403 = vmatprep.subr.mxu0 0.0
  %1404 = vmatpush1.msra.mxu0 %v1216
  %1405 = vmatprep.subr.mxu0 0.0
  %1406 = vmatpush1.msra.mxu0 %v1217
  %1407 = vmatprep.subr.mxu0 0.0
  %1408 = vmatpush1.msra.mxu0 %v1218
  %1409 = vmatprep.subr.mxu0 0.0
  %1410 = vmatpush1.msra.mxu0 %v1219
  %1411 = vmatprep.subr.mxu0 0.0
  %1412 = vmatpush1.msra.mxu0 %v1220
  %1413 = vmatprep.subr.mxu0 0.0
  %1414 = vmatpush1.msra.mxu0 %v1221
  %1415 = vmatprep.subr.mxu0 0.0
  %1416 = vmatpush1.msra.mxu0 %v1222
  %1417 = vmatprep.subr.mxu0 0.0
  %1418 = vmatpush1.msra.mxu0 %v1223
  %1419 = vmatprep.subr.mxu0 0.0
  %1420 = vmatpush1.msra.mxu0 %v1224
  %1421 = vmatprep.subr.mxu0 0.0
  %1422 = vmatpush1.msra.mxu0 %v1225
  %1423 = vmatprep.subr.mxu0 0.0
  %1424 = vmatpush1.msra.mxu0 %v1226
  %1425 = vmatprep.subr.mxu0 0.0
  %1426 = vmatpush1.msra.mxu0 %v1227
  %1427 = vmatprep.subr.mxu0 0.0
  %1428 = vmatpush1.msra.mxu0 %v1228
  %1429 = vmatprep.subr.mxu0 0.0
  %1430 = vmatpush1.msra.mxu0 %v1229
  %1431 = vmatprep.subr.mxu0 0.0
  %1432 = vmatpush1.msra.mxu0 %v1230
  %1433 = vmatprep.subr.mxu0 0.0
  %1434 = vmatpush1.msra.mxu0 %v1231
  %1435 = vmatprep.subr.mxu0 0.0
  %1436 = vmatpush1.msra.mxu0 %v1232
  %1437 = vmatprep.subr.mxu0 0.0
  %1438 = vmatpush1.msra.mxu0 %v1233
  %1439 = vmatprep.subr.mxu0 0.0
  %1440 = vmatpush1.msra.mxu0 %v1234
  %1441 = vmatprep.subr.mxu0 0.0
  %1442 = vmatpush1.msra.mxu0 %v1235
  %1443 = vmatprep.subr.mxu0 0.0
  %1444 = vmatpush1.msra.mxu0 %v1236
  %1445 = vmatprep.mubr.f32.mxu0 %v1140
  %1446 = vmatmul.mubr.f32.gmra.mrb[0].mxu0 %v1139
  %v1447 = vpop.f32.mrb[0].mxu0
  %v1448 = vadd.f32 %v1378, %v1447
  %v1449 = vpop.f32.mrb[0].mxu0
  %1450 = vdwg.mxu0
  %v1451 = vmax.f32 %v1448, 0.0
  %v1452 = vld [vmem:[%s1 + $0x1c0] sm:$0xff]
  %v1453 = vld [vmem:[%s1 + $0x1c8] sm:$0xff]
  %v1454 = vld [vmem:[%s1 + $0x1d0] sm:$0xff]
  %v1455 = vld [vmem:[%s1 + $0x1d8] sm:$0xff]
  %v1456 = vlaneseq
  %v1457 = vshrl.u32 %v1456, 7
  %v1458 = vsub.s32 4, %v1457
  %v1459 = vrot.slane %v17, %v1458
  %v1461 = vsel %vm222, %v1451, 0
  %1463 = vmatprep.subr.mxu0 0.0
  %1464 = vmatpush1.msra.mxu0 %v1452
  %1465 = vmatprep.subr.mxu0 0.0
  %1466 = vmatpush1.msra.mxu0 %v1453
  %1467 = vmatprep.subr.mxu0 0.0
  %1468 = vmatpush1.msra.mxu0 %v1454
  %1469 = vmatprep.subr.mxu0 0.0
  %1470 = vmatpush1.msra.mxu0 %v1455
  %1471 = vmatprep.subr.mxu0 0.0
  %1472 = vmatpush1.msra.mxu0 0.0
  %1473 = vmatprep.subr.mxu0 0.0
  %1474 = vmatpush1.msra.mxu0 0.0
  %1475 = vmatprep.subr.mxu0 0.0
  %1476 = vmatpush1.msra.mxu0 0.0
  %1477 = vmatprep.subr.mxu0 0.0
  %1478 = vmatpush1.msra.mxu0 0.0
  %1479 = vmatprep.subr.mxu0 0.0
  %1480 = vmatpush1.msra.mxu0 0.0
  %1481 = vmatprep.subr.mxu0 0.0
  %1482 = vmatpush1.msra.mxu0 0.0
  %1483 = vmatprep.subr.mxu0 0.0
  %1484 = vmatpush1.msra.mxu0 0.0
  %1485 = vmatprep.subr.mxu0 0.0
  %1486 = vmatpush1.msra.mxu0 0.0
  %1487 = vmatprep.subr.mxu0 0.0
  %1488 = vmatpush1.msra.mxu0 0.0
  %1489 = vmatprep.subr.mxu0 0.0
  %1490 = vmatpush1.msra.mxu0 0.0
  %1491 = vmatprep.subr.mxu0 0.0
  %1492 = vmatpush1.msra.mxu0 0.0
  %1493 = vmatprep.subr.mxu0 0.0
  %1494 = vmatpush1.msra.mxu0 0.0
  %1495 = vmatprep.subr.mxu0 0.0
  %1496 = vmatpush1.msra.mxu0 0.0
  %1497 = vmatprep.subr.mxu0 0.0
  %1498 = vmatpush1.msra.mxu0 0.0
  %1499 = vmatprep.subr.mxu0 0.0
  %1500 = vmatpush1.msra.mxu0 0.0
  %1501 = vmatprep.subr.mxu0 0.0
  %1502 = vmatpush1.msra.mxu0 0.0
  %1503 = vmatprep.subr.mxu0 0.0
  %1504 = vmatpush1.msra.mxu0 0.0
  %1505 = vmatprep.subr.mxu0 0.0
  %1506 = vmatpush1.msra.mxu0 0.0
  %1507 = vmatprep.subr.mxu0 0.0
  %1508 = vmatpush1.msra.mxu0 0.0
  %1509 = vmatprep.subr.mxu0 0.0
  %1510 = vmatpush1.msra.mxu0 0.0
  %1511 = vmatprep.subr.mxu0 0.0
  %1512 = vmatpush1.msra.mxu0 0.0
  %1513 = vmatprep.subr.mxu0 0.0
  %1514 = vmatpush1.msra.mxu0 0.0
  %1515 = vmatprep.subr.mxu0 0.0
  %1516 = vmatpush1.msra.mxu0 0.0
  %1517 = vmatprep.subr.mxu0 0.0
  %1518 = vmatpush1.msra.mxu0 0.0
  %1519 = vmatprep.subr.mxu0 0.0
  %1520 = vmatpush1.msra.mxu0 0.0
  %1521 = vmatprep.subr.mxu0 0.0
  %1522 = vmatpush1.msra.mxu0 0.0
  %1523 = vmatprep.subr.mxu0 0.0
  %1524 = vmatpush1.msra.mxu0 0.0
  %1525 = vmatprep.subr.mxu0 0.0
  %1526 = vmatpush1.msra.mxu0 0.0
  %1527 = vmatprep.mubr.f32.mxu0 0.0
  %1528 = vmatmul.mubr.f32.gmra.mrb[0].mxu0 %v1461
  %v1529 = vpop.f32.mrb[0].mxu0
  %v1530 = vadd.f32 %v1459, %v1529
  %v1531 = vpop.f32.mrb[0].mxu0
  %1532 = vdwg.mxu0
  %v1533 = vmax.f32 %v1530, 0.0
  %v1534 = vld [vmem:[%s1 + $0x1e8] sm:$0x1]
  %v1535 = vlaneseq
  %v1536 = vshrl.u32 %v1535, 7
  %v1537 = vsub.s32 0, %v1536
  %v1538 = vrot.slane %v1534, %v1537
  %v1539 = vmul.f32 %v1533, %v1538
  %v1540 = vsel %vm222, %v1539, 0.0
  %1541 = vadd.xlane.f32.xlu0 %v1540
  %v1542 = vpop.xlane.xlu0 %1541
  %v1543 = vlaneseq
  %v1544 = vshrl.u32 %v1543, 7
  %v1545 = vsub.s32 5, %v1544
  %v1546 = vrot.slane %v17, %v1545
  %v1547 = vadd.f32 %v1542, %v1546
  %v1548 = vsub.f32 0.0, %v1547
  %v1549 = vmul.f32 %v1548, 1.442695
  %v1550 = vpow.pop %v1549
  %v1551 = vadd.f32 %v1550, 1.0
  %v1552 = vrcp.pop %v1551
  %v1553 = vmul.f32 %v1552, 6.0
  %v1554 = vadd.f32 %v1553, -3.0
  %vm1555 = vcmask 7168
  %1556 = vst.msk [vmem:[%s4] sm:$0xff] %vm1555, %v1554
  // Predicated region
  $region18: #{tpu_custom_call.1} parent=0 // pred_check
    _
  $region19: #{tpu_custom_call.1} parent=0 // pred_check_branch
    %1558 = sbr.rel (0) target = $region21
  $region20: #{tpu_custom_call.1} parent=0 // pred_region
    _
  $region21: #{tpu_custom_call.1} parent=0 // pred_fallthru
    _
  // Predicated region
  $region22: #{tpu_custom_call.1} parent=0 // pred_check
    _
  $region23: #{tpu_custom_call.1} parent=0 // pred_check_branch
    %1560 = sbr.rel (0) target = $region25
  $region24: #{tpu_custom_call.1} parent=0 // pred_region
    _
  $region25: #{tpu_custom_call.1} parent=0 // pred_fallthru
    _

</llo_original>
